<compile_context>
chip_gen: v6e
topology: v6e:2x2x1
jax: 0.10.0
libtpu: 0.0.40
codegen_flags: <defaults>
</compile_context>

<pallas_src>
import functools

import jax
import jax.numpy as jnp
from jax import lax
from jax.experimental import pallas as pl
from jax.experimental.pallas import tpu as pltpu


# -----------------------------------------------------------------------------
# Kernels
# -----------------------------------------------------------------------------
def _lstm_recurrence_kernel(time_chunk, unroll,
                            xp_ref, whh_ref, h0_ref, c0_ref,
                            y_ref, hn_ref, cn_ref):
    """One grid step = `time_chunk` LSTM time steps for one batch tile.

    xp_ref : (T_c, B_t, 4H) bf16  pre-projected inputs (+ fused bias)
    whh_ref: (H, 4H)        bf16  recurrent weights, ready for h @ W
    h0/c0  : (B_t, H)       fp32  initial state
    y_ref  : (T_c, B_t, H)  bf16  hidden states for this chunk
    hn/cn  : (B_t, H)       fp32  resident carry / final state (written every chunk)
    """
    chunk = pl.program_id(1)

    @pl.when(chunk == 0)
    def _():
        hn_ref[...] = h0_ref[...]
        cn_ref[...] = c0_ref[...]

    w = whh_ref[...]                       # (H, 4H) bf16, VMEM-resident
    hidden = w.shape[0]

    def step(t, carry):
        h_prev, c_prev = carry             # fp32 (B_t, H)
        # Single merged gate matmul: (B_t, H) @ (H, 4H) on the MXU.
        gates = (xp_ref[t].astype(jnp.float32) +
                 jnp.dot(h_prev.astype(w.dtype), w,
                         preferred_element_type=jnp.float32))   # (B_t, 4H) fp32
        i_g = jax.nn.sigmoid(gates[:, 0 * hidden:1 * hidden])
        f_g = jax.nn.sigmoid(gates[:, 1 * hidden:2 * hidden])
        g_g = jnp.tanh(gates[:, 2 * hidden:3 * hidden])
        o_g = jax.nn.sigmoid(gates[:, 3 * hidden:4 * hidden])

        c_new = f_g * c_prev + i_g * g_g
        h_new = o_g * jnp.tanh(c_new)
        y_ref[t] = h_new.astype(y_ref.dtype)
        return h_new, c_new

    h_fin, c_fin = lax.fori_loop(0, time_chunk, step,
                                 (hn_ref[...], cn_ref[...]), unroll=unroll)
    # Write the carry every chunk (safe output-residency pattern).
    hn_ref[...] = h_fin
    cn_ref[...] = c_fin


def _head_kernel(y_ref, w_ref, b_ref, o_ref):
    """Output Linear tile: (m_t, H) @ (H, v_t) + b, bf16 in / fp32 accumulate."""
    acc = jnp.dot(y_ref[...], w_ref[...], preferred_element_type=jnp.float32)
    o_ref[...] = acc + b_ref[...]


# -----------------------------------------------------------------------------
# Tiling / VMEM heuristics
# -----------------------------------------------------------------------------
def _vmem_limit_bytes():
    """Raise the scoped-VMEM ceiling, leaving ~25% headroom for the compiler."""
    try:
        cap = pltpu.get_tpu_info().vmem_capacity_bytes
        return int(cap * 3 // 4)
    except Exception:  # older jax / interpret mode: keep compiler default
        return None


def _pick_batch_tile(batch):
    """Shard the batch across TensorCores (v7x megacore) when the split keeps
    the sublane dim a multiple of 8; otherwise keep the whole batch per block."""
    if batch % 16 == 0:
        return batch // 2
    return batch


def _default_time_chunk(seq_len, batch, hidden, budget_bytes=8 * 1024 * 1024):
    """Cap the per-chunk pipelined footprint (bf16 x_proj + bf16 Y, both 2x
    buffered) against a conservative VMEM budget (v7x-safe)."""
    per_step = batch * 4 * hidden * 2 * 2 + batch * hidden * 2 * 2
    max_steps = max(1, budget_bytes // max(per_step, 1))
    for cand in (64, 32, 16, 8, 4, 2, 1):
        if cand <= max_steps and seq_len % cand == 0:
            return cand
    return 1


def _pick_tile(dim, preferred):
    """Largest 128-multiple divisor of `dim` that is <= preferred; full dim if
    dim is small or has no clean 128-multiple divisor."""
    if dim <= preferred:
        return dim
    t = preferred - preferred % 128
    while t >= 128:
        if dim % t == 0:
            return t
        t -= 128
    return dim


# -----------------------------------------------------------------------------
# Wrapper (mirrors RNNModel.forward)
# -----------------------------------------------------------------------------
def rnn_model_forward(inputs, state, params, *, time_chunk=None):
    """inputs: (batch, seq) int32 token ids
    state:  (h0, c0), each (1, batch, hidden) float32
    returns (output, (h_n, c_n)) with output (seq*batch, vocab) fp32
    """
    w_ih, w_hh, b_ih, b_hh, w_out, b_out = (
        params["w_ih"], params["w_hh"], params["b_ih"], params["b_hh"],
        params["w_out"], params["b_out"])

    V = w_ih.shape[1]          # vocab_size
    H = w_hh.shape[1]          # num_hiddens
    B, S = inputs.shape

    if time_chunk is None:
        time_chunk = _default_time_chunk(S, B, H)
    assert S % time_chunk == 0, "seq length must be divisible by time_chunk"
    n_chunks = S // time_chunk
    b_tile = _pick_batch_tile(B)
    n_btiles = B // b_tile
    unroll = True if H < 512 else 4          # partial unroll at large H (vreg pressure)
    vmem_limit = _vmem_limit_bytes()

    # --- Hoisted input projection: one_hot(x) @ W_ih^T + (b_ih+b_hh) is a row
    # gather of W_ih^T.  Stored bf16, (S, B, 4H): gate k is a lane slice in-kernel.
    tokens_t = inputs.T                                           # (S, B)
    wih_t = jnp.asarray(w_ih.T, jnp.float32)                      # (V, 4H)
    bias = jnp.asarray(b_ih + b_hh, jnp.float32)                  # (4H,)
    x_proj = (jnp.take(wih_t, tokens_t, axis=0) + bias).astype(jnp.bfloat16)  # (S, B, 4H)

    # Recurrent weights as a single (H, 4H) bf16 matrix (h @ W form, i|f|g|o order).
    whh_m = jnp.asarray(w_hh.T, jnp.bfloat16)                     # (H, 4H)

    h0 = state[0][0].astype(jnp.float32)                          # (B, H)
    c0 = state[1][0].astype(jnp.float32)                          # (B, H)

    grid_spec = pltpu.PrefetchScalarGridSpec(
        num_scalar_prefetch=0,
        grid=(n_btiles, n_chunks),
        in_specs=[
            pl.BlockSpec((time_chunk, b_tile, 4 * H), lambda b, i: (i, b, 0)),  # x_proj
            pl.BlockSpec((H, 4 * H), lambda b, i: (0, 0)),                      # W_hh
            pl.BlockSpec((b_tile, H), lambda b, i: (b, 0)),                     # h0
            pl.BlockSpec((b_tile, H), lambda b, i: (b, 0)),                     # c0
        ],
        out_specs=[
            pl.BlockSpec((time_chunk, b_tile, H), lambda b, i: (i, b, 0)),      # Y chunk
            pl.BlockSpec((b_tile, H), lambda b, i: (b, 0)),                     # h carry/out
            pl.BlockSpec((b_tile, H), lambda b, i: (b, 0)),                     # c carry/out
        ],
    )

    y, h_n, c_n = pl.pallas_call(
        functools.partial(_lstm_recurrence_kernel, time_chunk, unroll),
        out_shape=(
            jax.ShapeDtypeStruct((S, B, H), jnp.bfloat16),
            jax.ShapeDtypeStruct((B, H), jnp.float32),
            jax.ShapeDtypeStruct((B, H), jnp.float32),
        ),
        grid_spec=grid_spec,
        compiler_params=pltpu.CompilerParams(
            # batch axis sharded across cores (v7x); time axis strictly sequential
            dimension_semantics=("parallel", "arbitrary"),
            vmem_limit_bytes=vmem_limit),
    )(x_proj, whh_m, h0, c0)

    # --- Output Linear head: tiled (S*B, H) @ (H, V) + b, bf16 operands.
    y_flat = y.reshape(S * B, H)                                  # bf16
    wout_t = jnp.asarray(w_out.T, jnp.bfloat16)                   # (H, V)
    bout = jnp.asarray(b_out[None, :], jnp.float32)               # (1, V)

    M = S * B
    m_tile = _pick_tile(M, 256)
    v_tile = _pick_tile(V, 512)

    output = pl.pallas_call(
        _head_kernel,
        out_shape=jax.ShapeDtypeStruct((M, V), jnp.float32),
        grid_spec=pltpu.PrefetchScalarGridSpec(
            num_scalar_prefetch=0,
            grid=(M // m_tile, V // v_tile),
            in_specs=[
                pl.BlockSpec((m_tile, H), lambda i, j: (i, 0)),
                pl.BlockSpec((H, v_tile), lambda i, j: (0, j)),
                pl.BlockSpec((1, v_tile), lambda i, j: (0, j)),
            ],
            out_specs=pl.BlockSpec((m_tile, v_tile), lambda i, j: (i, j)),
        ),
        compiler_params=pltpu.CompilerParams(
            dimension_semantics=("parallel", "parallel"),
            vmem_limit_bytes=vmem_limit),
    )(y_flat, wout_t, bout)

    return output, (h_n[None], c_n[None])


# -----------------------------------------------------------------------------
# Params + pure-JAX reference
# -----------------------------------------------------------------------------
def init_params(key, vocab_size, num_hiddens):
    """Synthetic params matching nn.LSTM(vocab, H) + nn.Linear(H, vocab)."""
    ks = jax.random.split(key, 6)
    scale = 0.1
    return {
        "w_ih": scale * jax.random.normal(ks[0], (4 * num_hiddens, vocab_size), jnp.float32),
        "w_hh": scale * jax.random.normal(ks[1], (4 * num_hiddens, num_hiddens), jnp.float32),
        "b_ih": scale * jax.random.normal(ks[2], (4 * num_hiddens,), jnp.float32),
        "b_hh": scale * jax.random.normal(ks[3], (4 * num_hiddens,), jnp.float32),
        "w_out": scale * jax.random.normal(ks[4], (vocab_size, num_hiddens), jnp.float32),
        "b_out": scale * jax.random.normal(ks[5], (vocab_size,), jnp.float32),
    }


def reference_forward(inputs, state, params):
    """Pure-JAX fp32 reference of the same forward (correctness check)."""
    w_ih, w_hh, b_ih, b_hh, w_out, b_out = (
        params["w_ih"], params["w_hh"], params["b_ih"], params["b_hh"],
        params["w_out"], params["b_out"])
    V = w_ih.shape[1]
    H = w_hh.shape[1]
    x = jax.nn.one_hot(inputs.T, V, dtype=jnp.float32)  # (S, B, V)
    h, c = state[0][0], state[1][0]

    def step(carry, x_t):
        h, c = carry
        gates = x_t @ w_ih.T + h @ w_hh.T + b_ih + b_hh
        i = jax.nn.sigmoid(gates[:, 0 * H:1 * H])
        f = jax.nn.sigmoid(gates[:, 1 * H:2 * H])
        g = jnp.tanh(gates[:, 2 * H:3 * H])
        o = jax.nn.sigmoid(gates[:, 3 * H:4 * H])
        c = f * c + i * g
        h = o * jnp.tanh(c)
        return (h, c), h

    (h_n, c_n), ys = jax.lax.scan(step, (h, c), x)
    out = ys.reshape(-1, H) @ w_out.T + b_out
    return out, (h_n[None], c_n[None])


if __name__ == "__main__":
    # Small shapes consistent with the module: vocab=32, hidden=32, batch=2, seq=8
    vocab_size, num_hiddens, batch, seq = 32, 32, 2, 8

    key = jax.random.PRNGKey(0)
    k_tok, k_par = jax.random.split(key)
    params = init_params(k_par, vocab_size, num_hiddens)

    inputs = jax.random.randint(k_tok, (batch, seq), 0, vocab_size, dtype=jnp.int32)
    # begin_state for LSTM: (h0, c0), each (num_layers=1, batch, hidden)
    state = (jnp.zeros((1, batch, num_hiddens), jnp.float32),
             jnp.zeros((1, batch, num_hiddens), jnp.float32))

    out, (h_n, c_n) = rnn_model_forward(inputs, state, params)
    jax.block_until_ready((out, h_n, c_n))

    # Correctness check vs. pure-fp32 reference (bf16 matmul operands -> 2e-2 tol).
    ref_out, (ref_h, ref_c) = reference_forward(inputs, state, params)
    assert out.shape == (seq * batch, vocab_size)
    assert h_n.shape == (1, batch, num_hiddens) and c_n.shape == (1, batch, num_hiddens)
    assert jnp.allclose(out, ref_out, atol=2e-2, rtol=2e-2)
    assert jnp.allclose(h_n, ref_h, atol=2e-2, rtol=2e-2)
    assert jnp.allclose(c_n, ref_c, atol=2e-2, rtol=2e-2)

    print("KERNEL_OK")
</pallas_src>

<mosaic_0001>
module attributes {stable_mosaic.version = 11 : i64} {
  func.func @_lstm_recurrence_kernel(%arg0: i32, %arg1: i32, %arg2: memref<8x2x128xbf16, #tpu.memory_space<vmem>>, %arg3: memref<32x128xbf16, #tpu.memory_space<vmem>>, %arg4: memref<2x32xf32, #tpu.memory_space<vmem>>, %arg5: memref<2x32xf32, #tpu.memory_space<vmem>>, %arg6: memref<8x2x32xbf16, #tpu.memory_space<vmem>>, %arg7: memref<2x32xf32, #tpu.memory_space<vmem>>, %arg8: memref<2x32xf32, #tpu.memory_space<vmem>>) attributes {dimension_semantics = [#tpu.dimension_semantics<parallel>, #tpu.dimension_semantics<arbitrary>], iteration_bounds = array<i64: 1, 1>, scalar_prefetch = 0 : i64, scratch_operands = 0 : i64, tpu.core_type = #tpu.core_type<tc>, window_params = [{transform_indices = @transform_0, window_bounds = array<i64: 8, 2, 128>}, {pipeline_mode = #tpu.pipeline_mode<synchronous>, transform_indices = @transform_1, window_bounds = array<i64: 32, 128>}, {transform_indices = @transform_2, window_bounds = array<i64: 2, 32>}, {transform_indices = @transform_3, window_bounds = array<i64: 2, 32>}, {transform_indices = @transform_4, window_bounds = array<i64: 8, 2, 32>}, {transform_indices = @transform_5, window_bounds = array<i64: 2, 32>}, {transform_indices = @transform_6, window_bounds = array<i64: 2, 32>}]} {
    %c0_i32 = arith.constant 0 : i32
    %0 = arith.cmpi eq, %arg1, %c0_i32 : i32
    %1 = arith.extui %0 : i1 to i32
    %c0_i32_0 = arith.constant 0 : i32
    %2 = arith.cmpi ne, %1, %c0_i32_0 : i32
    scf.if %2 {
      %c0_74 = arith.constant 0 : index
      %c0_75 = arith.constant 0 : index
      %304 = vector.load %arg4[%c0_74, %c0_75] : memref<2x32xf32, #tpu.memory_space<vmem>>, vector<2x32xf32>
      %c0_76 = arith.constant 0 : index
      %c0_77 = arith.constant 0 : index
      %305 = vector.load %arg7[%c0_76, %c0_77] : memref<2x32xf32, #tpu.memory_space<vmem>>, vector<2x32xf32>
      tpu.vector_store %arg7[%c0_76, %c0_77], %304 {strides = array<i32>} : memref<2x32xf32, #tpu.memory_space<vmem>>, vector<2x32xf32>,
      %c0_78 = arith.constant 0 : index
      %c0_79 = arith.constant 0 : index
      %306 = vector.load %arg5[%c0_78, %c0_79] : memref<2x32xf32, #tpu.memory_space<vmem>>, vector<2x32xf32>
      %c0_80 = arith.constant 0 : index
      %c0_81 = arith.constant 0 : index
      %307 = vector.load %arg8[%c0_80, %c0_81] : memref<2x32xf32, #tpu.memory_space<vmem>>, vector<2x32xf32>
      tpu.vector_store %arg8[%c0_80, %c0_81], %306 {strides = array<i32>} : memref<2x32xf32, #tpu.memory_space<vmem>>, vector<2x32xf32>,
    } else {
    }
    %c0 = arith.constant 0 : index
    %c0_1 = arith.constant 0 : index
    %3 = vector.load %arg3[%c0, %c0_1] : memref<32x128xbf16, #tpu.memory_space<vmem>>, vector<32x128xbf16>
    %c0_2 = arith.constant 0 : index
    %c0_3 = arith.constant 0 : index
    %4 = vector.load %arg7[%c0_2, %c0_3] : memref<2x32xf32, #tpu.memory_space<vmem>>, vector<2x32xf32>
    %c0_4 = arith.constant 0 : index
    %c0_5 = arith.constant 0 : index
    %5 = vector.load %arg8[%c0_4, %c0_5] : memref<2x32xf32, #tpu.memory_space<vmem>>, vector<2x32xf32>
    %c0_i32_6 = arith.constant 0 : i32
    %6 = arith.index_cast %c0_i32_6 : i32 to index
    %c0_7 = arith.constant 0 : index
    %c0_8 = arith.constant 0 : index
    %7 = vector.load %arg2[%6, %c0_7, %c0_8] : memref<8x2x128xbf16, #tpu.memory_space<vmem>>, vector<1x2x128xbf16>
    %8 = vector.shape_cast %7 : vector<1x2x128xbf16> to vector<2x128xbf16>
    %9 = arith.extf %8 : vector<2x128xbf16> to vector<2x128xf32>
    %10 = arith.truncf %4 : vector<2x32xf32> to vector<2x32xbf16>
    %cst = arith.constant dense<0.000000e+00> : vector<2x128xf32>
    %11 = tpu.matmul %10, %3, %cst {dimension_numbers = #tpu.dot_dimension_numbers<[1], [0], [0], [1], [0, 0, 1, 1], [], []>} : vector<2x32xbf16>, vector<32x128xbf16>, vector<2x128xf32> -> vector<2x128xf32>
    %12 = arith.addf %9, %11 : vector<2x128xf32>
    %13 = vector.extract_strided_slice %12 {offsets = [0, 0], sizes = [2, 32], strides = [1, 1]} : vector<2x128xf32> to vector<2x32xf32>
    %14 = arith.negf %13 : vector<2x32xf32>
    %15 = math.exp %14 : vector<2x32xf32>
    %cst_9 = arith.constant 1.000000e+00 : f32
    %16 = vector.broadcast %cst_9 : f32 to vector<2x32xf32>
    %17 = arith.addf %16, %15 : vector<2x32xf32>
    %18 = arith.divf %16, %17 : vector<2x32xf32>
    %19 = vector.extract_strided_slice %12 {offsets = [0, 32], sizes = [2, 32], strides = [1, 1]} : vector<2x128xf32> to vector<2x32xf32>
    %20 = arith.negf %19 : vector<2x32xf32>
    %21 = math.exp %20 : vector<2x32xf32>
    %cst_10 = arith.constant 1.000000e+00 : f32
    %22 = vector.broadcast %cst_10 : f32 to vector<2x32xf32>
    %23 = arith.addf %22, %21 : vector<2x32xf32>
    %24 = arith.divf %22, %23 : vector<2x32xf32>
    %25 = vector.extract_strided_slice %12 {offsets = [0, 64], sizes = [2, 32], strides = [1, 1]} : vector<2x128xf32> to vector<2x32xf32>
    %26 = math.tanh %25 : vector<2x32xf32>
    %27 = vector.extract_strided_slice %12 {offsets = [0, 96], sizes = [2, 32], strides = [1, 1]} : vector<2x128xf32> to vector<2x32xf32>
    %28 = arith.negf %27 : vector<2x32xf32>
    %29 = math.exp %28 : vector<2x32xf32>
    %cst_11 = arith.constant 1.000000e+00 : f32
    %30 = vector.broadcast %cst_11 : f32 to vector<2x32xf32>
    %31 = arith.addf %30, %29 : vector<2x32xf32>
    %32 = arith.divf %30, %31 : vector<2x32xf32>
    %33 = arith.mulf %24, %5 : vector<2x32xf32>
    %34 = arith.mulf %18, %26 : vector<2x32xf32>
    %35 = arith.addf %33, %34 : vector<2x32xf32>
    %36 = math.tanh %35 : vector<2x32xf32>
    %37 = arith.mulf %32, %36 : vector<2x32xf32>
    %38 = arith.truncf %37 : vector<2x32xf32> to vector<2x32xbf16>
    %39 = arith.index_cast %c0_i32_6 : i32 to index
    %c0_12 = arith.constant 0 : index
    %c0_13 = arith.constant 0 : index
    %40 = vector.load %arg6[%39, %c0_12, %c0_13] : memref<8x2x32xbf16, #tpu.memory_space<vmem>>, vector<1x2x32xbf16>
    %41 = vector.shape_cast %40 : vector<1x2x32xbf16> to vector<2x32xbf16>
    %42 = vector.shape_cast %38 : vector<2x32xbf16> to vector<1x2x32xbf16>
    tpu.vector_store %arg6[%39, %c0_12, %c0_13], %42 {strides = array<i32>} : memref<8x2x32xbf16, #tpu.memory_space<vmem>>, vector<1x2x32xbf16>,
    %c1_i32 = arith.constant 1 : i32
    %43 = arith.index_cast %c1_i32 : i32 to index
    %c0_14 = arith.constant 0 : index
    %c0_15 = arith.constant 0 : index
    %44 = vector.load %arg2[%43, %c0_14, %c0_15] : memref<8x2x128xbf16, #tpu.memory_space<vmem>>, vector<1x2x128xbf16>
    %45 = vector.shape_cast %44 : vector<1x2x128xbf16> to vector<2x128xbf16>
    %46 = arith.extf %45 : vector<2x128xbf16> to vector<2x128xf32>
    %47 = arith.truncf %37 : vector<2x32xf32> to vector<2x32xbf16>
    %cst_16 = arith.constant dense<0.000000e+00> : vector<2x128xf32>
    %48 = tpu.matmul %47, %3, %cst_16 {dimension_numbers = #tpu.dot_dimension_numbers<[1], [0], [0], [1], [0, 0, 1, 1], [], []>} : vector<2x32xbf16>, vector<32x128xbf16>, vector<2x128xf32> -> vector<2x128xf32>
    %49 = arith.addf %46, %48 : vector<2x128xf32>
    %50 = vector.extract_strided_slice %49 {offsets = [0, 0], sizes = [2, 32], strides = [1, 1]} : vector<2x128xf32> to vector<2x32xf32>
    %51 = arith.negf %50 : vector<2x32xf32>
    %52 = math.exp %51 : vector<2x32xf32>
    %cst_17 = arith.constant 1.000000e+00 : f32
    %53 = vector.broadcast %cst_17 : f32 to vector<2x32xf32>
    %54 = arith.addf %53, %52 : vector<2x32xf32>
    %55 = arith.divf %53, %54 : vector<2x32xf32>
    %56 = vector.extract_strided_slice %49 {offsets = [0, 32], sizes = [2, 32], strides = [1, 1]} : vector<2x128xf32> to vector<2x32xf32>
    %57 = arith.negf %56 : vector<2x32xf32>
    %58 = math.exp %57 : vector<2x32xf32>
    %cst_18 = arith.constant 1.000000e+00 : f32
    %59 = vector.broadcast %cst_18 : f32 to vector<2x32xf32>
    %60 = arith.addf %59, %58 : vector<2x32xf32>
    %61 = arith.divf %59, %60 : vector<2x32xf32>
    %62 = vector.extract_strided_slice %49 {offsets = [0, 64], sizes = [2, 32], strides = [1, 1]} : vector<2x128xf32> to vector<2x32xf32>
    %63 = math.tanh %62 : vector<2x32xf32>
    %64 = vector.extract_strided_slice %49 {offsets = [0, 96], sizes = [2, 32], strides = [1, 1]} : vector<2x128xf32> to vector<2x32xf32>
    %65 = arith.negf %64 : vector<2x32xf32>
    %66 = math.exp %65 : vector<2x32xf32>
    %cst_19 = arith.constant 1.000000e+00 : f32
    %67 = vector.broadcast %cst_19 : f32 to vector<2x32xf32>
    %68 = arith.addf %67, %66 : vector<2x32xf32>
    %69 = arith.divf %67, %68 : vector<2x32xf32>
    %70 = arith.mulf %61, %35 : vector<2x32xf32>
    %71 = arith.mulf %55, %63 : vector<2x32xf32>
    %72 = arith.addf %70, %71 : vector<2x32xf32>
    %73 = math.tanh %72 : vector<2x32xf32>
    %74 = arith.mulf %69, %73 : vector<2x32xf32>
    %75 = arith.truncf %74 : vector<2x32xf32> to vector<2x32xbf16>
    %76 = arith.index_cast %c1_i32 : i32 to index
    %c0_20 = arith.constant 0 : index
    %c0_21 = arith.constant 0 : index
    %77 = vector.load %arg6[%76, %c0_20, %c0_21] : memref<8x2x32xbf16, #tpu.memory_space<vmem>>, vector<1x2x32xbf16>
    %78 = vector.shape_cast %77 : vector<1x2x32xbf16> to vector<2x32xbf16>
    %79 = vector.shape_cast %75 : vector<2x32xbf16> to vector<1x2x32xbf16>
    tpu.vector_store %arg6[%76, %c0_20, %c0_21], %79 {strides = array<i32>} : memref<8x2x32xbf16, #tpu.memory_space<vmem>>, vector<1x2x32xbf16>,
    %c2_i32 = arith.constant 2 : i32
    %80 = arith.index_cast %c2_i32 : i32 to index
    %c0_22 = arith.constant 0 : index
    %c0_23 = arith.constant 0 : index
    %81 = vector.load %arg2[%80, %c0_22, %c0_23] : memref<8x2x128xbf16, #tpu.memory_space<vmem>>, vector<1x2x128xbf16>
    %82 = vector.shape_cast %81 : vector<1x2x128xbf16> to vector<2x128xbf16>
    %83 = arith.extf %82 : vector<2x128xbf16> to vector<2x128xf32>
    %84 = arith.truncf %74 : vector<2x32xf32> to vector<2x32xbf16>
    %cst_24 = arith.constant dense<0.000000e+00> : vector<2x128xf32>
    %85 = tpu.matmul %84, %3, %cst_24 {dimension_numbers = #tpu.dot_dimension_numbers<[1], [0], [0], [1], [0, 0, 1, 1], [], []>} : vector<2x32xbf16>, vector<32x128xbf16>, vector<2x128xf32> -> vector<2x128xf32>
    %86 = arith.addf %83, %85 : vector<2x128xf32>
    %87 = vector.extract_strided_slice %86 {offsets = [0, 0], sizes = [2, 32], strides = [1, 1]} : vector<2x128xf32> to vector<2x32xf32>
    %88 = arith.negf %87 : vector<2x32xf32>
    %89 = math.exp %88 : vector<2x32xf32>
    %cst_25 = arith.constant 1.000000e+00 : f32
    %90 = vector.broadcast %cst_25 : f32 to vector<2x32xf32>
    %91 = arith.addf %90, %89 : vector<2x32xf32>
    %92 = arith.divf %90, %91 : vector<2x32xf32>
    %93 = vector.extract_strided_slice %86 {offsets = [0, 32], sizes = [2, 32], strides = [1, 1]} : vector<2x128xf32> to vector<2x32xf32>
    %94 = arith.negf %93 : vector<2x32xf32>
    %95 = math.exp %94 : vector<2x32xf32>
    %cst_26 = arith.constant 1.000000e+00 : f32
    %96 = vector.broadcast %cst_26 : f32 to vector<2x32xf32>
    %97 = arith.addf %96, %95 : vector<2x32xf32>
    %98 = arith.divf %96, %97 : vector<2x32xf32>
    %99 = vector.extract_strided_slice %86 {offsets = [0, 64], sizes = [2, 32], strides = [1, 1]} : vector<2x128xf32> to vector<2x32xf32>
    %100 = math.tanh %99 : vector<2x32xf32>
    %101 = vector.extract_strided_slice %86 {offsets = [0, 96], sizes = [2, 32], strides = [1, 1]} : vector<2x128xf32> to vector<2x32xf32>
    %102 = arith.negf %101 : vector<2x32xf32>
    %103 = math.exp %102 : vector<2x32xf32>
    %cst_27 = arith.constant 1.000000e+00 : f32
    %104 = vector.broadcast %cst_27 : f32 to vector<2x32xf32>
    %105 = arith.addf %104, %103 : vector<2x32xf32>
    %106 = arith.divf %104, %105 : vector<2x32xf32>
    %107 = arith.mulf %98, %72 : vector<2x32xf32>
    %108 = arith.mulf %92, %100 : vector<2x32xf32>
    %109 = arith.addf %107, %108 : vector<2x32xf32>
    %110 = math.tanh %109 : vector<2x32xf32>
    %111 = arith.mulf %106, %110 : vector<2x32xf32>
    %112 = arith.truncf %111 : vector<2x32xf32> to vector<2x32xbf16>
    %113 = arith.index_cast %c2_i32 : i32 to index
    %c0_28 = arith.constant 0 : index
    %c0_29 = arith.constant 0 : index
    %114 = vector.load %arg6[%113, %c0_28, %c0_29] : memref<8x2x32xbf16, #tpu.memory_space<vmem>>, vector<1x2x32xbf16>
    %115 = vector.shape_cast %114 : vector<1x2x32xbf16> to vector<2x32xbf16>
    %116 = vector.shape_cast %112 : vector<2x32xbf16> to vector<1x2x32xbf16>
    tpu.vector_store %arg6[%113, %c0_28, %c0_29], %116 {strides = array<i32>} : memref<8x2x32xbf16, #tpu.memory_space<vmem>>, vector<1x2x32xbf16>,
    %c3_i32 = arith.constant 3 : i32
    %117 = arith.index_cast %c3_i32 : i32 to index
    %c0_30 = arith.constant 0 : index
    %c0_31 = arith.constant 0 : index
    %118 = vector.load %arg2[%117, %c0_30, %c0_31] : memref<8x2x128xbf16, #tpu.memory_space<vmem>>, vector<1x2x128xbf16>
    %119 = vector.shape_cast %118 : vector<1x2x128xbf16> to vector<2x128xbf16>
    %120 = arith.extf %119 : vector<2x128xbf16> to vector<2x128xf32>
    %121 = arith.truncf %111 : vector<2x32xf32> to vector<2x32xbf16>
    %cst_32 = arith.constant dense<0.000000e+00> : vector<2x128xf32>
    %122 = tpu.matmul %121, %3, %cst_32 {dimension_numbers = #tpu.dot_dimension_numbers<[1], [0], [0], [1], [0, 0, 1, 1], [], []>} : vector<2x32xbf16>, vector<32x128xbf16>, vector<2x128xf32> -> vector<2x128xf32>
    %123 = arith.addf %120, %122 : vector<2x128xf32>
    %124 = vector.extract_strided_slice %123 {offsets = [0, 0], sizes = [2, 32], strides = [1, 1]} : vector<2x128xf32> to vector<2x32xf32>
    %125 = arith.negf %124 : vector<2x32xf32>
    %126 = math.exp %125 : vector<2x32xf32>
    %cst_33 = arith.constant 1.000000e+00 : f32
    %127 = vector.broadcast %cst_33 : f32 to vector<2x32xf32>
    %128 = arith.addf %127, %126 : vector<2x32xf32>
    %129 = arith.divf %127, %128 : vector<2x32xf32>
    %130 = vector.extract_strided_slice %123 {offsets = [0, 32], sizes = [2, 32], strides = [1, 1]} : vector<2x128xf32> to vector<2x32xf32>
    %131 = arith.negf %130 : vector<2x32xf32>
    %132 = math.exp %131 : vector<2x32xf32>
    %cst_34 = arith.constant 1.000000e+00 : f32
    %133 = vector.broadcast %cst_34 : f32 to vector<2x32xf32>
    %134 = arith.addf %133, %132 : vector<2x32xf32>
    %135 = arith.divf %133, %134 : vector<2x32xf32>
    %136 = vector.extract_strided_slice %123 {offsets = [0, 64], sizes = [2, 32], strides = [1, 1]} : vector<2x128xf32> to vector<2x32xf32>
    %137 = math.tanh %136 : vector<2x32xf32>
    %138 = vector.extract_strided_slice %123 {offsets = [0, 96], sizes = [2, 32], strides = [1, 1]} : vector<2x128xf32> to vector<2x32xf32>
    %139 = arith.negf %138 : vector<2x32xf32>
    %140 = math.exp %139 : vector<2x32xf32>
    %cst_35 = arith.constant 1.000000e+00 : f32
    %141 = vector.broadcast %cst_35 : f32 to vector<2x32xf32>
    %142 = arith.addf %141, %140 : vector<2x32xf32>
    %143 = arith.divf %141, %142 : vector<2x32xf32>
    %144 = arith.mulf %135, %109 : vector<2x32xf32>
    %145 = arith.mulf %129, %137 : vector<2x32xf32>
    %146 = arith.addf %144, %145 : vector<2x32xf32>
    %147 = math.tanh %146 : vector<2x32xf32>
    %148 = arith.mulf %143, %147 : vector<2x32xf32>
    %149 = arith.truncf %148 : vector<2x32xf32> to vector<2x32xbf16>
    %150 = arith.index_cast %c3_i32 : i32 to index
    %c0_36 = arith.constant 0 : index
    %c0_37 = arith.constant 0 : index
    %151 = vector.load %arg6[%150, %c0_36, %c0_37] : memref<8x2x32xbf16, #tpu.memory_space<vmem>>, vector<1x2x32xbf16>
    %152 = vector.shape_cast %151 : vector<1x2x32xbf16> to vector<2x32xbf16>
    %153 = vector.shape_cast %149 : vector<2x32xbf16> to vector<1x2x32xbf16>
    tpu.vector_store %arg6[%150, %c0_36, %c0_37], %153 {strides = array<i32>} : memref<8x2x32xbf16, #tpu.memory_space<vmem>>, vector<1x2x32xbf16>,
    %c4_i32 = arith.constant 4 : i32
    %154 = arith.index_cast %c4_i32 : i32 to index
    %c0_38 = arith.constant 0 : index
    %c0_39 = arith.constant 0 : index
    %155 = vector.load %arg2[%154, %c0_38, %c0_39] : memref<8x2x128xbf16, #tpu.memory_space<vmem>>, vector<1x2x128xbf16>
    %156 = vector.shape_cast %155 : vector<1x2x128xbf16> to vector<2x128xbf16>
    %157 = arith.extf %156 : vector<2x128xbf16> to vector<2x128xf32>
    %158 = arith.truncf %148 : vector<2x32xf32> to vector<2x32xbf16>
    %cst_40 = arith.constant dense<0.000000e+00> : vector<2x128xf32>
    %159 = tpu.matmul %158, %3, %cst_40 {dimension_numbers = #tpu.dot_dimension_numbers<[1], [0], [0], [1], [0, 0, 1, 1], [], []>} : vector<2x32xbf16>, vector<32x128xbf16>, vector<2x128xf32> -> vector<2x128xf32>
    %160 = arith.addf %157, %159 : vector<2x128xf32>
    %161 = vector.extract_strided_slice %160 {offsets = [0, 0], sizes = [2, 32], strides = [1, 1]} : vector<2x128xf32> to vector<2x32xf32>
    %162 = arith.negf %161 : vector<2x32xf32>
    %163 = math.exp %162 : vector<2x32xf32>
    %cst_41 = arith.constant 1.000000e+00 : f32
    %164 = vector.broadcast %cst_41 : f32 to vector<2x32xf32>
    %165 = arith.addf %164, %163 : vector<2x32xf32>
    %166 = arith.divf %164, %165 : vector<2x32xf32>
    %167 = vector.extract_strided_slice %160 {offsets = [0, 32], sizes = [2, 32], strides = [1, 1]} : vector<2x128xf32> to vector<2x32xf32>
    %168 = arith.negf %167 : vector<2x32xf32>
    %169 = math.exp %168 : vector<2x32xf32>
    %cst_42 = arith.constant 1.000000e+00 : f32
    %170 = vector.broadcast %cst_42 : f32 to vector<2x32xf32>
    %171 = arith.addf %170, %169 : vector<2x32xf32>
    %172 = arith.divf %170, %171 : vector<2x32xf32>
    %173 = vector.extract_strided_slice %160 {offsets = [0, 64], sizes = [2, 32], strides = [1, 1]} : vector<2x128xf32> to vector<2x32xf32>
    %174 = math.tanh %173 : vector<2x32xf32>
    %175 = vector.extract_strided_slice %160 {offsets = [0, 96], sizes = [2, 32], strides = [1, 1]} : vector<2x128xf32> to vector<2x32xf32>
    %176 = arith.negf %175 : vector<2x32xf32>
    %177 = math.exp %176 : vector<2x32xf32>
    %cst_43 = arith.constant 1.000000e+00 : f32
    %178 = vector.broadcast %cst_43 : f32 to vector<2x32xf32>
    %179 = arith.addf %178, %177 : vector<2x32xf32>
    %180 = arith.divf %178, %179 : vector<2x32xf32>
    %181 = arith.mulf %172, %146 : vector<2x32xf32>
    %182 = arith.mulf %166, %174 : vector<2x32xf32>
    %183 = arith.addf %181, %182 : vector<2x32xf32>
    %184 = math.tanh %183 : vector<2x32xf32>
    %185 = arith.mulf %180, %184 : vector<2x32xf32>
    %186 = arith.truncf %185 : vector<2x32xf32> to vector<2x32xbf16>
    %187 = arith.index_cast %c4_i32 : i32 to index
    %c0_44 = arith.constant 0 : index
    %c0_45 = arith.constant 0 : index
    %188 = vector.load %arg6[%187, %c0_44, %c0_45] : memref<8x2x32xbf16, #tpu.memory_space<vmem>>, vector<1x2x32xbf16>
    %189 = vector.shape_cast %188 : vector<1x2x32xbf16> to vector<2x32xbf16>
    %190 = vector.shape_cast %186 : vector<2x32xbf16> to vector<1x2x32xbf16>
    tpu.vector_store %arg6[%187, %c0_44, %c0_45], %190 {strides = array<i32>} : memref<8x2x32xbf16, #tpu.memory_space<vmem>>, vector<1x2x32xbf16>,
    %c5_i32 = arith.constant 5 : i32
    %191 = arith.index_cast %c5_i32 : i32 to index
    %c0_46 = arith.constant 0 : index
    %c0_47 = arith.constant 0 : index
    %192 = vector.load %arg2[%191, %c0_46, %c0_47] : memref<8x2x128xbf16, #tpu.memory_space<vmem>>, vector<1x2x128xbf16>
    %193 = vector.shape_cast %192 : vector<1x2x128xbf16> to vector<2x128xbf16>
    %194 = arith.extf %193 : vector<2x128xbf16> to vector<2x128xf32>
    %195 = arith.truncf %185 : vector<2x32xf32> to vector<2x32xbf16>
    %cst_48 = arith.constant dense<0.000000e+00> : vector<2x128xf32>
    %196 = tpu.matmul %195, %3, %cst_48 {dimension_numbers = #tpu.dot_dimension_numbers<[1], [0], [0], [1], [0, 0, 1, 1], [], []>} : vector<2x32xbf16>, vector<32x128xbf16>, vector<2x128xf32> -> vector<2x128xf32>
    %197 = arith.addf %194, %196 : vector<2x128xf32>
    %198 = vector.extract_strided_slice %197 {offsets = [0, 0], sizes = [2, 32], strides = [1, 1]} : vector<2x128xf32> to vector<2x32xf32>
    %199 = arith.negf %198 : vector<2x32xf32>
    %200 = math.exp %199 : vector<2x32xf32>
    %cst_49 = arith.constant 1.000000e+00 : f32
    %201 = vector.broadcast %cst_49 : f32 to vector<2x32xf32>
    %202 = arith.addf %201, %200 : vector<2x32xf32>
    %203 = arith.divf %201, %202 : vector<2x32xf32>
    %204 = vector.extract_strided_slice %197 {offsets = [0, 32], sizes = [2, 32], strides = [1, 1]} : vector<2x128xf32> to vector<2x32xf32>
    %205 = arith.negf %204 : vector<2x32xf32>
    %206 = math.exp %205 : vector<2x32xf32>
    %cst_50 = arith.constant 1.000000e+00 : f32
    %207 = vector.broadcast %cst_50 : f32 to vector<2x32xf32>
    %208 = arith.addf %207, %206 : vector<2x32xf32>
    %209 = arith.divf %207, %208 : vector<2x32xf32>
    %210 = vector.extract_strided_slice %197 {offsets = [0, 64], sizes = [2, 32], strides = [1, 1]} : vector<2x128xf32> to vector<2x32xf32>
    %211 = math.tanh %210 : vector<2x32xf32>
    %212 = vector.extract_strided_slice %197 {offsets = [0, 96], sizes = [2, 32], strides = [1, 1]} : vector<2x128xf32> to vector<2x32xf32>
    %213 = arith.negf %212 : vector<2x32xf32>
    %214 = math.exp %213 : vector<2x32xf32>
    %cst_51 = arith.constant 1.000000e+00 : f32
    %215 = vector.broadcast %cst_51 : f32 to vector<2x32xf32>
    %216 = arith.addf %215, %214 : vector<2x32xf32>
    %217 = arith.divf %215, %216 : vector<2x32xf32>
    %218 = arith.mulf %209, %183 : vector<2x32xf32>
    %219 = arith.mulf %203, %211 : vector<2x32xf32>
    %220 = arith.addf %218, %219 : vector<2x32xf32>
    %221 = math.tanh %220 : vector<2x32xf32>
    %222 = arith.mulf %217, %221 : vector<2x32xf32>
    %223 = arith.truncf %222 : vector<2x32xf32> to vector<2x32xbf16>
    %224 = arith.index_cast %c5_i32 : i32 to index
    %c0_52 = arith.constant 0 : index
    %c0_53 = arith.constant 0 : index
    %225 = vector.load %arg6[%224, %c0_52, %c0_53] : memref<8x2x32xbf16, #tpu.memory_space<vmem>>, vector<1x2x32xbf16>
    %226 = vector.shape_cast %225 : vector<1x2x32xbf16> to vector<2x32xbf16>
    %227 = vector.shape_cast %223 : vector<2x32xbf16> to vector<1x2x32xbf16>
    tpu.vector_store %arg6[%224, %c0_52, %c0_53], %227 {strides = array<i32>} : memref<8x2x32xbf16, #tpu.memory_space<vmem>>, vector<1x2x32xbf16>,
    %c6_i32 = arith.constant 6 : i32
    %228 = arith.index_cast %c6_i32 : i32 to index
    %c0_54 = arith.constant 0 : index
    %c0_55 = arith.constant 0 : index
    %229 = vector.load %arg2[%228, %c0_54, %c0_55] : memref<8x2x128xbf16, #tpu.memory_space<vmem>>, vector<1x2x128xbf16>
    %230 = vector.shape_cast %229 : vector<1x2x128xbf16> to vector<2x128xbf16>
    %231 = arith.extf %230 : vector<2x128xbf16> to vector<2x128xf32>
    %232 = arith.truncf %222 : vector<2x32xf32> to vector<2x32xbf16>
    %cst_56 = arith.constant dense<0.000000e+00> : vector<2x128xf32>
    %233 = tpu.matmul %232, %3, %cst_56 {dimension_numbers = #tpu.dot_dimension_numbers<[1], [0], [0], [1], [0, 0, 1, 1], [], []>} : vector<2x32xbf16>, vector<32x128xbf16>, vector<2x128xf32> -> vector<2x128xf32>
    %234 = arith.addf %231, %233 : vector<2x128xf32>
    %235 = vector.extract_strided_slice %234 {offsets = [0, 0], sizes = [2, 32], strides = [1, 1]} : vector<2x128xf32> to vector<2x32xf32>
    %236 = arith.negf %235 : vector<2x32xf32>
    %237 = math.exp %236 : vector<2x32xf32>
    %cst_57 = arith.constant 1.000000e+00 : f32
    %238 = vector.broadcast %cst_57 : f32 to vector<2x32xf32>
    %239 = arith.addf %238, %237 : vector<2x32xf32>
    %240 = arith.divf %238, %239 : vector<2x32xf32>
    %241 = vector.extract_strided_slice %234 {offsets = [0, 32], sizes = [2, 32], strides = [1, 1]} : vector<2x128xf32> to vector<2x32xf32>
    %242 = arith.negf %241 : vector<2x32xf32>
    %243 = math.exp %242 : vector<2x32xf32>
    %cst_58 = arith.constant 1.000000e+00 : f32
    %244 = vector.broadcast %cst_58 : f32 to vector<2x32xf32>
    %245 = arith.addf %244, %243 : vector<2x32xf32>
    %246 = arith.divf %244, %245 : vector<2x32xf32>
    %247 = vector.extract_strided_slice %234 {offsets = [0, 64], sizes = [2, 32], strides = [1, 1]} : vector<2x128xf32> to vector<2x32xf32>
    %248 = math.tanh %247 : vector<2x32xf32>
    %249 = vector.extract_strided_slice %234 {offsets = [0, 96], sizes = [2, 32], strides = [1, 1]} : vector<2x128xf32> to vector<2x32xf32>
    %250 = arith.negf %249 : vector<2x32xf32>
    %251 = math.exp %250 : vector<2x32xf32>
    %cst_59 = arith.constant 1.000000e+00 : f32
    %252 = vector.broadcast %cst_59 : f32 to vector<2x32xf32>
    %253 = arith.addf %252, %251 : vector<2x32xf32>
    %254 = arith.divf %252, %253 : vector<2x32xf32>
    %255 = arith.mulf %246, %220 : vector<2x32xf32>
    %256 = arith.mulf %240, %248 : vector<2x32xf32>
    %257 = arith.addf %255, %256 : vector<2x32xf32>
    %258 = math.tanh %257 : vector<2x32xf32>
    %259 = arith.mulf %254, %258 : vector<2x32xf32>
    %260 = arith.truncf %259 : vector<2x32xf32> to vector<2x32xbf16>
    %261 = arith.index_cast %c6_i32 : i32 to index
    %c0_60 = arith.constant 0 : index
    %c0_61 = arith.constant 0 : index
    %262 = vector.load %arg6[%261, %c0_60, %c0_61] : memref<8x2x32xbf16, #tpu.memory_space<vmem>>, vector<1x2x32xbf16>
    %263 = vector.shape_cast %262 : vector<1x2x32xbf16> to vector<2x32xbf16>
    %264 = vector.shape_cast %260 : vector<2x32xbf16> to vector<1x2x32xbf16>
    tpu.vector_store %arg6[%261, %c0_60, %c0_61], %264 {strides = array<i32>} : memref<8x2x32xbf16, #tpu.memory_space<vmem>>, vector<1x2x32xbf16>,
    %c7_i32 = arith.constant 7 : i32
    %265 = arith.index_cast %c7_i32 : i32 to index
    %c0_62 = arith.constant 0 : index
    %c0_63 = arith.constant 0 : index
    %266 = vector.load %arg2[%265, %c0_62, %c0_63] : memref<8x2x128xbf16, #tpu.memory_space<vmem>>, vector<1x2x128xbf16>
    %267 = vector.shape_cast %266 : vector<1x2x128xbf16> to vector<2x128xbf16>
    %268 = arith.extf %267 : vector<2x128xbf16> to vector<2x128xf32>
    %269 = arith.truncf %259 : vector<2x32xf32> to vector<2x32xbf16>
    %cst_64 = arith.constant dense<0.000000e+00> : vector<2x128xf32>
    %270 = tpu.matmul %269, %3, %cst_64 {dimension_numbers = #tpu.dot_dimension_numbers<[1], [0], [0], [1], [0, 0, 1, 1], [], []>} : vector<2x32xbf16>, vector<32x128xbf16>, vector<2x128xf32> -> vector<2x128xf32>
    %271 = arith.addf %268, %270 : vector<2x128xf32>
    %272 = vector.extract_strided_slice %271 {offsets = [0, 0], sizes = [2, 32], strides = [1, 1]} : vector<2x128xf32> to vector<2x32xf32>
    %273 = arith.negf %272 : vector<2x32xf32>
    %274 = math.exp %273 : vector<2x32xf32>
    %cst_65 = arith.constant 1.000000e+00 : f32
    %275 = vector.broadcast %cst_65 : f32 to vector<2x32xf32>
    %276 = arith.addf %275, %274 : vector<2x32xf32>
    %277 = arith.divf %275, %276 : vector<2x32xf32>
    %278 = vector.extract_strided_slice %271 {offsets = [0, 32], sizes = [2, 32], strides = [1, 1]} : vector<2x128xf32> to vector<2x32xf32>
    %279 = arith.negf %278 : vector<2x32xf32>
    %280 = math.exp %279 : vector<2x32xf32>
    %cst_66 = arith.constant 1.000000e+00 : f32
    %281 = vector.broadcast %cst_66 : f32 to vector<2x32xf32>
    %282 = arith.addf %281, %280 : vector<2x32xf32>
    %283 = arith.divf %281, %282 : vector<2x32xf32>
    %284 = vector.extract_strided_slice %271 {offsets = [0, 64], sizes = [2, 32], strides = [1, 1]} : vector<2x128xf32> to vector<2x32xf32>
    %285 = math.tanh %284 : vector<2x32xf32>
    %286 = vector.extract_strided_slice %271 {offsets = [0, 96], sizes = [2, 32], strides = [1, 1]} : vector<2x128xf32> to vector<2x32xf32>
    %287 = arith.negf %286 : vector<2x32xf32>
    %288 = math.exp %287 : vector<2x32xf32>
    %cst_67 = arith.constant 1.000000e+00 : f32
    %289 = vector.broadcast %cst_67 : f32 to vector<2x32xf32>
    %290 = arith.addf %289, %288 : vector<2x32xf32>
    %291 = arith.divf %289, %290 : vector<2x32xf32>
    %292 = arith.mulf %283, %257 : vector<2x32xf32>
    %293 = arith.mulf %277, %285 : vector<2x32xf32>
    %294 = arith.addf %292, %293 : vector<2x32xf32>
    %295 = math.tanh %294 : vector<2x32xf32>
    %296 = arith.mulf %291, %295 : vector<2x32xf32>
    %297 = arith.truncf %296 : vector<2x32xf32> to vector<2x32xbf16>
    %298 = arith.index_cast %c7_i32 : i32 to index
    %c0_68 = arith.constant 0 : index
    %c0_69 = arith.constant 0 : index
    %299 = vector.load %arg6[%298, %c0_68, %c0_69] : memref<8x2x32xbf16, #tpu.memory_space<vmem>>, vector<1x2x32xbf16>
    %300 = vector.shape_cast %299 : vector<1x2x32xbf16> to vector<2x32xbf16>
    %301 = vector.shape_cast %297 : vector<2x32xbf16> to vector<1x2x32xbf16>
    tpu.vector_store %arg6[%298, %c0_68, %c0_69], %301 {strides = array<i32>} : memref<8x2x32xbf16, #tpu.memory_space<vmem>>, vector<1x2x32xbf16>,
    %c8_i32 = arith.constant 8 : i32
    %c0_70 = arith.constant 0 : index
    %c0_71 = arith.constant 0 : index
    %302 = vector.load %arg7[%c0_70, %c0_71] : memref<2x32xf32, #tpu.memory_space<vmem>>, vector<2x32xf32>
    tpu.vector_store %arg7[%c0_70, %c0_71], %296 {strides = array<i32>} : memref<2x32xf32, #tpu.memory_space<vmem>>, vector<2x32xf32>,
    %c0_72 = arith.constant 0 : index
    %c0_73 = arith.constant 0 : index
    %303 = vector.load %arg8[%c0_72, %c0_73] : memref<2x32xf32, #tpu.memory_space<vmem>>, vector<2x32xf32>
    tpu.vector_store %arg8[%c0_72, %c0_73], %294 {strides = array<i32>} : memref<2x32xf32, #tpu.memory_space<vmem>>, vector<2x32xf32>,
    return
  }
  func.func @transform_0(%arg0: i32, %arg1: i32) -> (i32, i32, i32) {
    %c0_i32 = arith.constant 0 : i32
    %c0_i32_0 = arith.constant 0 : i32
    return %arg1, %arg0, %c0_i32 : i32, i32, i32
  }
  func.func @transform_1(%arg0: i32, %arg1: i32) -> (i32, i32) {
    %c0_i32 = arith.constant 0 : i32
    %c0_i32_0 = arith.constant 0 : i32
    %c0_i32_1 = arith.constant 0 : i32
    return %c0_i32, %c0_i32_0 : i32, i32
  }
  func.func @transform_2(%arg0: i32, %arg1: i32) -> (i32, i32) {
    %c0_i32 = arith.constant 0 : i32
    %c0_i32_0 = arith.constant 0 : i32
    return %arg0, %c0_i32 : i32, i32
  }
  func.func @transform_3(%arg0: i32, %arg1: i32) -> (i32, i32) {
    %c0_i32 = arith.constant 0 : i32
    %c0_i32_0 = arith.constant 0 : i32
    return %arg0, %c0_i32 : i32, i32
  }
  func.func @transform_4(%arg0: i32, %arg1: i32) -> (i32, i32, i32) {
    %c0_i32 = arith.constant 0 : i32
    %c0_i32_0 = arith.constant 0 : i32
    return %arg1, %arg0, %c0_i32 : i32, i32, i32
  }
  func.func @transform_5(%arg0: i32, %arg1: i32) -> (i32, i32) {
    %c0_i32 = arith.constant 0 : i32
    %c0_i32_0 = arith.constant 0 : i32
    return %arg0, %c0_i32 : i32, i32
  }
  func.func @transform_6(%arg0: i32, %arg1: i32) -> (i32, i32) {
    %c0_i32 = arith.constant 0 : i32
    %c0_i32_0 = arith.constant 0 : i32
    return %arg0, %c0_i32 : i32, i32
  }
}

</mosaic_0001>

<llo_original>
// kernel: tpu_custom_call.1
$region0: #{tpu_custom_call.1}
  #allocation0 [shape = 'u32[]', space=smem, size = 0x4, offset = 0x4, fixed_abs, tag = 'smem constant byte address 0x4 - core index']
  #allocation1 [shape = 'u32[144,128]{1,0:T(1,128)}', space=vmem, size = 0x12000, scoped, tag = 'internal scratch']
  %s0 = inlined_call_operand.hbm [shape: bf16[8,2,128], index: 0, kind: input, shape index: {}]
  %s1 = inlined_call_operand.hbm [shape: bf16[32,128], index: 1, kind: input, shape index: {}]
  %s2 = inlined_call_operand.vmem [shape: f32[2,32], index: 2, kind: input, shape index: {}]
  %s3 = inlined_call_operand.vmem [shape: f32[2,32], index: 3, kind: input, shape index: {}]
  %s4 = inlined_call_operand.hbm [shape: bf16[8,2,32], index: 4, kind: output, shape index: {0}]
  %s5 = inlined_call_operand.hbm [shape: f32[2,32], index: 5, kind: output, shape index: {1}]
  %s6 = inlined_call_operand.hbm [shape: f32[2,32], index: 6, kind: output, shape index: {2}]
  %7 = xla_tuple %s4, %s5, %s6
  %s8 = sld [smem:[#allocation0]]
  $region54: #{tpu_custom_call.1} parent=0
    _
  %s10 = ssub.s32 1, %s8
  %s11 = scalar_select 0, %s10, %s8
  $region1: #{tpu_custom_call.1} parent=0
    #allocation2 [shape = 'u8[4096]{0}', space=vmem, size = 0x1000, scoped, tag = 'input window, operand 0, single buffered']
    #allocation3 [shape = 's32[1]{0}', space=sflag, size = 0x4, scoped, tag = 'scoped memory for tpu_custom_call.1']
    #allocation4 [shape = 's32[1]{0}', space=sflag, size = 0x4, scoped, tag = 'scoped memory for tpu_custom_call.1']
    #allocation5 [shape = 'u8[8192]{0}', space=vmem, size = 0x2000, scoped, tag = 'input window, operand 1, single buffered']
    #allocation6 [shape = 's32[1]{0}', space=sflag, size = 0x4, scoped, tag = 'scoped memory for tpu_custom_call.1']
    #allocation7 [shape = 'u8[4096]{0}', space=vmem, size = 0x1000, scoped, tag = 'output window, operand 0, single buffered']
    #allocation8 [shape = 'u8[1024]{0}', space=vmem, size = 0x400, scoped, tag = 'output window, operand 1, single buffered']
    #allocation9 [shape = 's32[1]{0}', space=sflag, size = 0x4, scoped, tag = 'scoped memory for tpu_custom_call.1']
    #allocation10 [shape = 'u8[1024]{0}', space=vmem, size = 0x400, scoped, tag = 'output window, operand 2, single buffered']
    %12 = vsyncpa [#allocation3], 0
    %13 = vsyncpa [#allocation6], 0
    %14 = vsyncpa [#allocation4], 0
    %15 = vsyncpa [#allocation9], 0
    // Predicated region
    $region2: #{tpu_custom_call.1} parent=1 // pred_check
      _
    $region3: #{tpu_custom_call.1} parent=1 // pred_check_branch
      %17 = sbr.rel (0) target = $region5
    $region4: #{tpu_custom_call.1} parent=1 // pred_region
      %s19 = ssub.s32 128, 128
      %20 = vsyncadd [#allocation3], %s19
      %s21 = sshll.u32 [#allocation2], 4
      %s22 = int_to_ptr.vmem [resolvable:$true] %s21
      %27 = dma.hbm_to_vmem [thread:$0]  %s0, 128, %s22, [#allocation3], 16, 16, 1
    $region5: #{tpu_custom_call.1} parent=1 // pred_fallthru
      _
    // Predicated region
    $region6: #{tpu_custom_call.1} parent=1 // pred_check
      _
    $region7: #{tpu_custom_call.1} parent=1 // pred_check_branch
      %29 = sbr.rel (0) target = $region9
    $region8: #{tpu_custom_call.1} parent=1 // pred_region
      %s31 = ssub.s32 256, 256
      %32 = vsyncadd [#allocation6], %s31
      %s33 = sshll.u32 [#allocation5], 4
      %s34 = int_to_ptr.vmem [resolvable:$true] %s33
      %39 = dma.hbm_to_vmem [thread:$0]  %s1, 256, %s34, [#allocation6], 64, 64, 4
    $region9: #{tpu_custom_call.1} parent=1 // pred_fallthru
      _
    // Predicated region
    $region10: #{tpu_custom_call.1} parent=1 // pred_check
      _
    $region11: #{tpu_custom_call.1} parent=1 // pred_check_branch
      %41 = sbr.rel (0) target = $region13
    $region12: #{tpu_custom_call.1} parent=1 // pred_region
      _
    $region13: #{tpu_custom_call.1} parent=1 // pred_fallthru
      _
    // Predicated region
    $region14: #{tpu_custom_call.1} parent=1 // pred_check
      _
    $region15: #{tpu_custom_call.1} parent=1 // pred_check_branch
      %43 = sbr.rel (0) target = $region17
    $region16: #{tpu_custom_call.1} parent=1 // pred_region
      _
    $region17: #{tpu_custom_call.1} parent=1 // pred_fallthru
      _
    // Predicated region
    $region18: #{tpu_custom_call.1} parent=1 // pred_check
      _
    $region19: #{tpu_custom_call.1} parent=1 // pred_check_branch
      %45 = sbr.rel (0) target = $region21
    $region20: #{tpu_custom_call.1} parent=1 // pred_region
      %46 = dma.done [#allocation3], 128
    $region21: #{tpu_custom_call.1} parent=1 // pred_fallthru
      _
    // Predicated region
    $region22: #{tpu_custom_call.1} parent=1 // pred_check
      _
    $region23: #{tpu_custom_call.1} parent=1 // pred_check_branch
      %48 = sbr.rel (0) target = $region25
    $region24: #{tpu_custom_call.1} parent=1 // pred_region
      %49 = dma.done [#allocation6], 256
    $region25: #{tpu_custom_call.1} parent=1 // pred_fallthru
      _
    %p51 = scmp.eq.s32.totalorder 0, 0
    // Predicated region
    $region26: #{tpu_custom_call.1} parent=1 // pred_check
      %p52 = pneg %p51
    $region27: #{tpu_custom_call.1} parent=1 // pred_check_branch
      %54 = sbr.rel (%p52) target = $region29
    $region28: #{tpu_custom_call.1} parent=1 // pred_region
      %v55 = vld [vmem:[%s2] sm:$0x3]
      %vm56 = vcmask 254976
      %57 = vst.msk [vmem:[#allocation8] sm:$0x3] %vm56, %v55
      %v58 = vld [vmem:[%s3] sm:$0x3]
      %59 = vst.msk [vmem:[#allocation10] sm:$0x3] %vm56, %v58
    $region29: #{tpu_custom_call.1} parent=1 // pred_fallthru
      _
    %v60 = vld [vmem:[#allocation5] sm:$0xf]
    %v61 = vld [vmem:[#allocation5 + $0x4] sm:$0xf]
    %v62 = vld [vmem:[#allocation5 + $0x8] sm:$0xf]
    %v63 = vld [vmem:[#allocation5 + $0xc] sm:$0xf]
    %v64 = vld [vmem:[#allocation8] sm:$0x3]
    %v65 = vld [vmem:[#allocation10] sm:$0x3]
    %v66 = vld [vmem:[#allocation2] sm:$0x1]
    %v67 = vunpack.c.l.bf16 %v66
    %v68 = vpack.c.bf16 %v64, %v64
    %v73 = vunpack.c.l.b16 %v60
    %v74 = vunpack.c.l.b16 %v61
    %v75 = vunpack.c.l.b16 %v62
    %v76 = vunpack.c.l.b16 %v63
    %v77 = vpack.c.b16 %v74, %v73
    %v78 = vpack.c.b16 %v76, %v75
    %vm81 = vcmask 261120
    %v83 = vsel %vm81, %v68, 0
    %85 = vmatprep.subr.bf16.mxu0 0
    %86 = vmatpush1.bf16.msra.mxu0 0
    %87 = vmatprep.subr.bf16.mxu0 0
    %88 = vmatpush1.bf16.msra.mxu0 0
    %89 = vmatprep.subr.bf16.mxu0 0
    %90 = vmatpush1.bf16.msra.mxu0 0
    %91 = vmatprep.subr.bf16.mxu0 0
    %92 = vmatpush1.bf16.msra.mxu0 0
    %93 = vmatprep.subr.bf16.mxu0 0
    %94 = vmatpush1.bf16.msra.mxu0 0
    %95 = vmatprep.subr.bf16.mxu0 0
    %96 = vmatpush1.bf16.msra.mxu0 0
    %97 = vmatprep.subr.bf16.mxu0 0
    %98 = vmatpush1.bf16.msra.mxu0 %v78
    %99 = vmatprep.subr.bf16.mxu0 0
    %100 = vmatpush1.bf16.msra.mxu0 %v77
    %101 = vmatprep.subr.bf16.mxu0 0
    %102 = vmatpush2.bf16.msra.mxu0 0
    %103 = vmatprep.subr.bf16.mxu0 0
    %104 = vmatpush2.bf16.msra.mxu0 0
    %105 = vmatprep.subr.bf16.mxu0 0
    %106 = vmatpush2.bf16.msra.mxu0 0
    %107 = vmatprep.subr.bf16.mxu0 0
    %108 = vmatpush2.bf16.msra.mxu0 0
    %109 = vmatprep.subr.bf16.mxu0 0
    %110 = vmatpush2.bf16.msra.mxu0 0
    %111 = vmatprep.subr.bf16.mxu0 0
    %112 = vmatpush2.bf16.msra.mxu0 0
    %113 = vmatprep.subr.bf16.mxu0 0
    %114 = vmatpush2.bf16.msra.mxu0 0
    %115 = vmatprep.subr.bf16.mxu0 0
    %116 = vmatpush2.bf16.msra.mxu0 0
    %117 = vmatprep.mubr.bf16.mxu0 0
    %118 = vmatmul.mubr.bf16.gmra.mxu0 %v83
    %v119 = vpop.f32.mrf.mxu0
    %v120 = vadd.f32 0.0, %v119
    %v121 = vpop.f32.mrf.mxu0
    %v122 = vpop.f32.mrf.mxu0
    %v123 = vpop.f32.mrf.mxu0
    %124 = vdwg.mxu0
    %v125 = vadd.f32 %v67, %v120
    %v126 = vxor.u32 %v125, 2147483648
    %v127 = vmul.f32 %v126, 1.442695
    %v128 = vpow.pop %v127
    %v129 = vadd.f32 %v128, 1.0
    %v130 = vrcp.pop %v129
    %v131 = vmul.f32 1.0, %v130
    %v132 = vtanh.pop %v125
    %v135 = vunpack.c.l.s4 1983009808
    %v136 = vunpack.c.0.s8 %v135
    %v137 = vlaneseq
    %v138 = vshrl.u32 %v137, 7
    %v139 = vsub.s32 %v136, %v138
    %v140 = vrot.slane %v65, %v139
    %141 = vrot.lane.b32.xlu0 %v140, 32
    %v142 = vpop.permute.xlu0 %141
    %v144 = vmul.f32 %v131, %v142
    %146 = vrot.lane.b32.xlu0 %v132, 64
    %v147 = vpop.permute.xlu0 %146
    %v149 = vmul.f32 %v131, %v147
    %151 = vrot.lane.b32.xlu0 %v149, 32
    %v152 = vpop.permute.xlu0 %151
    %v154 = vadd.f32 %v144, %v152
    %v155 = vtanh.pop %v154
    %157 = vrot.lane.b32.xlu0 %v155, 64
    %v158 = vpop.permute.xlu0 %157
    %v160 = vmul.f32 %v131, %v158
    %v161 = vpack.c.bf16 %v160, %v160
    %v164 = vunpack.c.l.s4 1966171168
    %v165 = vunpack.c.0.s8 %v164
    %v166 = vlaneseq
    %v167 = vshrl.u32 %v166, 7
    %v168 = vsub.s32 %v165, %v167
    %v169 = vrot.slane %v161, %v168
    %v171 = vunpack.c.l.s4 1966171168
    %v172 = vunpack.c.0.s8 %v171
    %v173 = vlaneseq
    %v174 = vshrl.u32 %v173, 7
    %v175 = vsub.s32 %v172, %v174
    %v176 = vrot.slane %v169, %v175
    %177 = vrot.lane.b32.xlu0 %v176, 32
    %v178 = vpop.permute.xlu0 %177
    %vm180 = vcmask 253952
    %181 = vst.msk [vmem:[#allocation7] sm:$0x1] %vm180, %v178
    %s182 = scalar_lea.vmem [#allocation2], 1
    %v183 = vld [vmem:[%s182] sm:$0x1]
    %v184 = vunpack.c.l.bf16 %v183
    %185 = vrot.lane.b32.xlu0 %v161, 32
    %v186 = vpop.permute.xlu0 %185
    %v188 = vsel %vm81, %v186, 0
    %190 = vmatprep.subr.bf16.mxu0 0
    %191 = vmatpush1.bf16.msra.mxu0 0
    %192 = vmatprep.subr.bf16.mxu0 0
    %193 = vmatpush1.bf16.msra.mxu0 0
    %194 = vmatprep.subr.bf16.mxu0 0
    %195 = vmatpush1.bf16.msra.mxu0 0
    %196 = vmatprep.subr.bf16.mxu0 0
    %197 = vmatpush1.bf16.msra.mxu0 0
    %198 = vmatprep.subr.bf16.mxu0 0
    %199 = vmatpush1.bf16.msra.mxu0 0
    %200 = vmatprep.subr.bf16.mxu0 0
    %201 = vmatpush1.bf16.msra.mxu0 0
    %202 = vmatprep.subr.bf16.mxu0 0
    %203 = vmatpush1.bf16.msra.mxu0 %v78
    %204 = vmatprep.subr.bf16.mxu0 0
    %205 = vmatpush1.bf16.msra.mxu0 %v77
    %206 = vmatprep.subr.bf16.mxu0 0
    %207 = vmatpush2.bf16.msra.mxu0 0
    %208 = vmatprep.subr.bf16.mxu0 0
    %209 = vmatpush2.bf16.msra.mxu0 0
    %210 = vmatprep.subr.bf16.mxu0 0
    %211 = vmatpush2.bf16.msra.mxu0 0
    %212 = vmatprep.subr.bf16.mxu0 0
    %213 = vmatpush2.bf16.msra.mxu0 0
    %214 = vmatprep.subr.bf16.mxu0 0
    %215 = vmatpush2.bf16.msra.mxu0 0
    %216 = vmatprep.subr.bf16.mxu0 0
    %217 = vmatpush2.bf16.msra.mxu0 0
    %218 = vmatprep.subr.bf16.mxu0 0
    %219 = vmatpush2.bf16.msra.mxu0 0
    %220 = vmatprep.subr.bf16.mxu0 0
    %221 = vmatpush2.bf16.msra.mxu0 0
    %222 = vmatprep.mubr.bf16.mxu0 0
    %223 = vmatmul.mubr.bf16.gmra.mxu0 %v188
    %v224 = vpop.f32.mrf.mxu0
    %v225 = vadd.f32 0.0, %v224
    %v226 = vpop.f32.mrf.mxu0
    %v227 = vpop.f32.mrf.mxu0
    %v228 = vpop.f32.mrf.mxu0
    %229 = vdwg.mxu0
    %v230 = vadd.f32 %v184, %v225
    %v231 = vxor.u32 %v230, 2147483648
    %v232 = vmul.f32 %v231, 1.442695
    %v233 = vpow.pop %v232
    %v234 = vadd.f32 %v233, 1.0
    %v235 = vrcp.pop %v234
    %v236 = vmul.f32 1.0, %v235
    %v237 = vtanh.pop %v230
    %v238 = vmul.f32 %v236, %v154
    %240 = vrot.lane.b32.xlu0 %v237, 64
    %v241 = vpop.permute.xlu0 %240
    %v243 = vmul.f32 %v236, %v241
    %245 = vrot.lane.b32.xlu0 %v243, 32
    %v246 = vpop.permute.xlu0 %245
    %v248 = vadd.f32 %v238, %v246
    %v249 = vtanh.pop %v248
    %251 = vrot.lane.b32.xlu0 %v249, 64
    %v252 = vpop.permute.xlu0 %251
    %v254 = vmul.f32 %v236, %v252
    %v255 = vpack.c.bf16 %v254, %v254
    %v258 = vunpack.c.l.s4 1966171168
    %v259 = vunpack.c.0.s8 %v258
    %v260 = vlaneseq
    %v261 = vshrl.u32 %v260, 7
    %v262 = vsub.s32 %v259, %v261
    %v263 = vrot.slane %v255, %v262
    %v265 = vunpack.c.l.s4 1966171168
    %v266 = vunpack.c.0.s8 %v265
    %v267 = vlaneseq
    %v268 = vshrl.u32 %v267, 7
    %v269 = vsub.s32 %v266, %v268
    %v270 = vrot.slane %v263, %v269
    %271 = vrot.lane.b32.xlu0 %v270, 32
    %v272 = vpop.permute.xlu0 %271
    %s274 = scalar_lea.vmem [#allocation7], 1
    %275 = vst.msk [vmem:[%s274] sm:$0x1] %vm180, %v272
    %s276 = scalar_lea.vmem [#allocation2], 2
    %v277 = vld [vmem:[%s276] sm:$0x1]
    %v278 = vunpack.c.l.bf16 %v277
    %279 = vrot.lane.b32.xlu0 %v255, 32
    %v280 = vpop.permute.xlu0 %279
    %v282 = vsel %vm81, %v280, 0
    %284 = vmatprep.subr.bf16.mxu0 0
    %285 = vmatpush1.bf16.msra.mxu0 0
    %286 = vmatprep.subr.bf16.mxu0 0
    %287 = vmatpush1.bf16.msra.mxu0 0
    %288 = vmatprep.subr.bf16.mxu0 0
    %289 = vmatpush1.bf16.msra.mxu0 0
    %290 = vmatprep.subr.bf16.mxu0 0
    %291 = vmatpush1.bf16.msra.mxu0 0
    %292 = vmatprep.subr.bf16.mxu0 0
    %293 = vmatpush1.bf16.msra.mxu0 0
    %294 = vmatprep.subr.bf16.mxu0 0
    %295 = vmatpush1.bf16.msra.mxu0 0
    %296 = vmatprep.subr.bf16.mxu0 0
    %297 = vmatpush1.bf16.msra.mxu0 %v78
    %298 = vmatprep.subr.bf16.mxu0 0
    %299 = vmatpush1.bf16.msra.mxu0 %v77
    %300 = vmatprep.subr.bf16.mxu0 0
    %301 = vmatpush2.bf16.msra.mxu0 0
    %302 = vmatprep.subr.bf16.mxu0 0
    %303 = vmatpush2.bf16.msra.mxu0 0
    %304 = vmatprep.subr.bf16.mxu0 0
    %305 = vmatpush2.bf16.msra.mxu0 0
    %306 = vmatprep.subr.bf16.mxu0 0
    %307 = vmatpush2.bf16.msra.mxu0 0
    %308 = vmatprep.subr.bf16.mxu0 0
    %309 = vmatpush2.bf16.msra.mxu0 0
    %310 = vmatprep.subr.bf16.mxu0 0
    %311 = vmatpush2.bf16.msra.mxu0 0
    %312 = vmatprep.subr.bf16.mxu0 0
    %313 = vmatpush2.bf16.msra.mxu0 0
    %314 = vmatprep.subr.bf16.mxu0 0
    %315 = vmatpush2.bf16.msra.mxu0 0
    %316 = vmatprep.mubr.bf16.mxu0 0
    %317 = vmatmul.mubr.bf16.gmra.mxu0 %v282
    %v318 = vpop.f32.mrf.mxu0
    %v319 = vadd.f32 0.0, %v318
    %v320 = vpop.f32.mrf.mxu0
    %v321 = vpop.f32.mrf.mxu0
    %v322 = vpop.f32.mrf.mxu0
    %323 = vdwg.mxu0
    %v324 = vadd.f32 %v278, %v319
    %v325 = vxor.u32 %v324, 2147483648
    %v326 = vmul.f32 %v325, 1.442695
    %v327 = vpow.pop %v326
    %v328 = vadd.f32 %v327, 1.0
    %v329 = vrcp.pop %v328
    %v330 = vmul.f32 1.0, %v329
    %v331 = vtanh.pop %v324
    %v332 = vmul.f32 %v330, %v248
    %334 = vrot.lane.b32.xlu0 %v331, 64
    %v335 = vpop.permute.xlu0 %334
    %v337 = vmul.f32 %v330, %v335
    %339 = vrot.lane.b32.xlu0 %v337, 32
    %v340 = vpop.permute.xlu0 %339
    %v342 = vadd.f32 %v332, %v340
    %v343 = vtanh.pop %v342
    %345 = vrot.lane.b32.xlu0 %v343, 64
    %v346 = vpop.permute.xlu0 %345
    %v348 = vmul.f32 %v330, %v346
    %v349 = vpack.c.bf16 %v348, %v348
    %v352 = vunpack.c.l.s4 1966171168
    %v353 = vunpack.c.0.s8 %v352
    %v354 = vlaneseq
    %v355 = vshrl.u32 %v354, 7
    %v356 = vsub.s32 %v353, %v355
    %v357 = vrot.slane %v349, %v356
    %v359 = vunpack.c.l.s4 1966171168
    %v360 = vunpack.c.0.s8 %v359
    %v361 = vlaneseq
    %v362 = vshrl.u32 %v361, 7
    %v363 = vsub.s32 %v360, %v362
    %v364 = vrot.slane %v357, %v363
    %365 = vrot.lane.b32.xlu0 %v364, 32
    %v366 = vpop.permute.xlu0 %365
    %s368 = scalar_lea.vmem [#allocation7], 2
    %369 = vst.msk [vmem:[%s368] sm:$0x1] %vm180, %v366
    %s370 = scalar_lea.vmem [#allocation2], 3
    %v371 = vld [vmem:[%s370] sm:$0x1]
    %v372 = vunpack.c.l.bf16 %v371
    %373 = vrot.lane.b32.xlu0 %v349, 32
    %v374 = vpop.permute.xlu0 %373
    %v376 = vsel %vm81, %v374, 0
    %378 = vmatprep.subr.bf16.mxu0 0
    %379 = vmatpush1.bf16.msra.mxu0 0
    %380 = vmatprep.subr.bf16.mxu0 0
    %381 = vmatpush1.bf16.msra.mxu0 0
    %382 = vmatprep.subr.bf16.mxu0 0
    %383 = vmatpush1.bf16.msra.mxu0 0
    %384 = vmatprep.subr.bf16.mxu0 0
    %385 = vmatpush1.bf16.msra.mxu0 0
    %386 = vmatprep.subr.bf16.mxu0 0
    %387 = vmatpush1.bf16.msra.mxu0 0
    %388 = vmatprep.subr.bf16.mxu0 0
    %389 = vmatpush1.bf16.msra.mxu0 0
    %390 = vmatprep.subr.bf16.mxu0 0
    %391 = vmatpush1.bf16.msra.mxu0 %v78
    %392 = vmatprep.subr.bf16.mxu0 0
    %393 = vmatpush1.bf16.msra.mxu0 %v77
    %394 = vmatprep.subr.bf16.mxu0 0
    %395 = vmatpush2.bf16.msra.mxu0 0
    %396 = vmatprep.subr.bf16.mxu0 0
    %397 = vmatpush2.bf16.msra.mxu0 0
    %398 = vmatprep.subr.bf16.mxu0 0
    %399 = vmatpush2.bf16.msra.mxu0 0
    %400 = vmatprep.subr.bf16.mxu0 0
    %401 = vmatpush2.bf16.msra.mxu0 0
    %402 = vmatprep.subr.bf16.mxu0 0
    %403 = vmatpush2.bf16.msra.mxu0 0
    %404 = vmatprep.subr.bf16.mxu0 0
    %405 = vmatpush2.bf16.msra.mxu0 0
    %406 = vmatprep.subr.bf16.mxu0 0
    %407 = vmatpush2.bf16.msra.mxu0 0
    %408 = vmatprep.subr.bf16.mxu0 0
    %409 = vmatpush2.bf16.msra.mxu0 0
    %410 = vmatprep.mubr.bf16.mxu0 0
    %411 = vmatmul.mubr.bf16.gmra.mxu0 %v376
    %v412 = vpop.f32.mrf.mxu0
    %v413 = vadd.f32 0.0, %v412
    %v414 = vpop.f32.mrf.mxu0
    %v415 = vpop.f32.mrf.mxu0
    %v416 = vpop.f32.mrf.mxu0
    %417 = vdwg.mxu0
    %v418 = vadd.f32 %v372, %v413
    %v419 = vxor.u32 %v418, 2147483648
    %v420 = vmul.f32 %v419, 1.442695
    %v421 = vpow.pop %v420
    %v422 = vadd.f32 %v421, 1.0
    %v423 = vrcp.pop %v422
    %v424 = vmul.f32 1.0, %v423
    %v425 = vtanh.pop %v418
    %v426 = vmul.f32 %v424, %v342
    %428 = vrot.lane.b32.xlu0 %v425, 64
    %v429 = vpop.permute.xlu0 %428
    %v431 = vmul.f32 %v424, %v429
    %433 = vrot.lane.b32.xlu0 %v431, 32
    %v434 = vpop.permute.xlu0 %433
    %v436 = vadd.f32 %v426, %v434
    %v437 = vtanh.pop %v436
    %439 = vrot.lane.b32.xlu0 %v437, 64
    %v440 = vpop.permute.xlu0 %439
    %v442 = vmul.f32 %v424, %v440
    %v443 = vpack.c.bf16 %v442, %v442
    %v446 = vunpack.c.l.s4 1966171168
    %v447 = vunpack.c.0.s8 %v446
    %v448 = vlaneseq
    %v449 = vshrl.u32 %v448, 7
    %v450 = vsub.s32 %v447, %v449
    %v451 = vrot.slane %v443, %v450
    %v453 = vunpack.c.l.s4 1966171168
    %v454 = vunpack.c.0.s8 %v453
    %v455 = vlaneseq
    %v456 = vshrl.u32 %v455, 7
    %v457 = vsub.s32 %v454, %v456
    %v458 = vrot.slane %v451, %v457
    %459 = vrot.lane.b32.xlu0 %v458, 32
    %v460 = vpop.permute.xlu0 %459
    %s462 = scalar_lea.vmem [#allocation7], 3
    %463 = vst.msk [vmem:[%s462] sm:$0x1] %vm180, %v460
    %s464 = scalar_lea.vmem [#allocation2], 4
    %v465 = vld [vmem:[%s464] sm:$0x1]
    %v466 = vunpack.c.l.bf16 %v465
    %467 = vrot.lane.b32.xlu0 %v443, 32
    %v468 = vpop.permute.xlu0 %467
    %v470 = vsel %vm81, %v468, 0
    %472 = vmatprep.subr.bf16.mxu0 0
    %473 = vmatpush1.bf16.msra.mxu0 0
    %474 = vmatprep.subr.bf16.mxu0 0
    %475 = vmatpush1.bf16.msra.mxu0 0
    %476 = vmatprep.subr.bf16.mxu0 0
    %477 = vmatpush1.bf16.msra.mxu0 0
    %478 = vmatprep.subr.bf16.mxu0 0
    %479 = vmatpush1.bf16.msra.mxu0 0
    %480 = vmatprep.subr.bf16.mxu0 0
    %481 = vmatpush1.bf16.msra.mxu0 0
    %482 = vmatprep.subr.bf16.mxu0 0
    %483 = vmatpush1.bf16.msra.mxu0 0
    %484 = vmatprep.subr.bf16.mxu0 0
    %485 = vmatpush1.bf16.msra.mxu0 %v78
    %486 = vmatprep.subr.bf16.mxu0 0
    %487 = vmatpush1.bf16.msra.mxu0 %v77
    %488 = vmatprep.subr.bf16.mxu0 0
    %489 = vmatpush2.bf16.msra.mxu0 0
    %490 = vmatprep.subr.bf16.mxu0 0
    %491 = vmatpush2.bf16.msra.mxu0 0
    %492 = vmatprep.subr.bf16.mxu0 0
    %493 = vmatpush2.bf16.msra.mxu0 0
    %494 = vmatprep.subr.bf16.mxu0 0
    %495 = vmatpush2.bf16.msra.mxu0 0
    %496 = vmatprep.subr.bf16.mxu0 0
    %497 = vmatpush2.bf16.msra.mxu0 0
    %498 = vmatprep.subr.bf16.mxu0 0
    %499 = vmatpush2.bf16.msra.mxu0 0
    %500 = vmatprep.subr.bf16.mxu0 0
    %501 = vmatpush2.bf16.msra.mxu0 0
    %502 = vmatprep.subr.bf16.mxu0 0
    %503 = vmatpush2.bf16.msra.mxu0 0
    %504 = vmatprep.mubr.bf16.mxu0 0
    %505 = vmatmul.mubr.bf16.gmra.mxu0 %v470
    %v506 = vpop.f32.mrf.mxu0
    %v507 = vadd.f32 0.0, %v506
    %v508 = vpop.f32.mrf.mxu0
    %v509 = vpop.f32.mrf.mxu0
    %v510 = vpop.f32.mrf.mxu0
    %511 = vdwg.mxu0
    %v512 = vadd.f32 %v466, %v507
    %v513 = vxor.u32 %v512, 2147483648
    %v514 = vmul.f32 %v513, 1.442695
    %v515 = vpow.pop %v514
    %v516 = vadd.f32 %v515, 1.0
    %v517 = vrcp.pop %v516
    %v518 = vmul.f32 1.0, %v517
    %v519 = vtanh.pop %v512
    %v520 = vmul.f32 %v518, %v436
    %522 = vrot.lane.b32.xlu0 %v519, 64
    %v523 = vpop.permute.xlu0 %522
    %v525 = vmul.f32 %v518, %v523
    %527 = vrot.lane.b32.xlu0 %v525, 32
    %v528 = vpop.permute.xlu0 %527
    %v530 = vadd.f32 %v520, %v528
    %v531 = vtanh.pop %v530
    %533 = vrot.lane.b32.xlu0 %v531, 64
    %v534 = vpop.permute.xlu0 %533
    %v536 = vmul.f32 %v518, %v534
    %v537 = vpack.c.bf16 %v536, %v536
    %v540 = vunpack.c.l.s4 1966171168
    %v541 = vunpack.c.0.s8 %v540
    %v542 = vlaneseq
    %v543 = vshrl.u32 %v542, 7
    %v544 = vsub.s32 %v541, %v543
    %v545 = vrot.slane %v537, %v544
    %v547 = vunpack.c.l.s4 1966171168
    %v548 = vunpack.c.0.s8 %v547
    %v549 = vlaneseq
    %v550 = vshrl.u32 %v549, 7
    %v551 = vsub.s32 %v548, %v550
    %v552 = vrot.slane %v545, %v551
    %553 = vrot.lane.b32.xlu0 %v552, 32
    %v554 = vpop.permute.xlu0 %553
    %s556 = scalar_lea.vmem [#allocation7], 4
    %557 = vst.msk [vmem:[%s556] sm:$0x1] %vm180, %v554
    %s558 = scalar_lea.vmem [#allocation2], 5
    %v559 = vld [vmem:[%s558] sm:$0x1]
    %v560 = vunpack.c.l.bf16 %v559
    %561 = vrot.lane.b32.xlu0 %v537, 32
    %v562 = vpop.permute.xlu0 %561
    %v564 = vsel %vm81, %v562, 0
    %566 = vmatprep.subr.bf16.mxu0 0
    %567 = vmatpush1.bf16.msra.mxu0 0
    %568 = vmatprep.subr.bf16.mxu0 0
    %569 = vmatpush1.bf16.msra.mxu0 0
    %570 = vmatprep.subr.bf16.mxu0 0
    %571 = vmatpush1.bf16.msra.mxu0 0
    %572 = vmatprep.subr.bf16.mxu0 0
    %573 = vmatpush1.bf16.msra.mxu0 0
    %574 = vmatprep.subr.bf16.mxu0 0
    %575 = vmatpush1.bf16.msra.mxu0 0
    %576 = vmatprep.subr.bf16.mxu0 0
    %577 = vmatpush1.bf16.msra.mxu0 0
    %578 = vmatprep.subr.bf16.mxu0 0
    %579 = vmatpush1.bf16.msra.mxu0 %v78
    %580 = vmatprep.subr.bf16.mxu0 0
    %581 = vmatpush1.bf16.msra.mxu0 %v77
    %582 = vmatprep.subr.bf16.mxu0 0
    %583 = vmatpush2.bf16.msra.mxu0 0
    %584 = vmatprep.subr.bf16.mxu0 0
    %585 = vmatpush2.bf16.msra.mxu0 0
    %586 = vmatprep.subr.bf16.mxu0 0
    %587 = vmatpush2.bf16.msra.mxu0 0
    %588 = vmatprep.subr.bf16.mxu0 0
    %589 = vmatpush2.bf16.msra.mxu0 0
    %590 = vmatprep.subr.bf16.mxu0 0
    %591 = vmatpush2.bf16.msra.mxu0 0
    %592 = vmatprep.subr.bf16.mxu0 0
    %593 = vmatpush2.bf16.msra.mxu0 0
    %594 = vmatprep.subr.bf16.mxu0 0
    %595 = vmatpush2.bf16.msra.mxu0 0
    %596 = vmatprep.subr.bf16.mxu0 0
    %597 = vmatpush2.bf16.msra.mxu0 0
    %598 = vmatprep.mubr.bf16.mxu0 0
    %599 = vmatmul.mubr.bf16.gmra.mxu0 %v564
    %v600 = vpop.f32.mrf.mxu0
    %v601 = vadd.f32 0.0, %v600
    %v602 = vpop.f32.mrf.mxu0
    %v603 = vpop.f32.mrf.mxu0
    %v604 = vpop.f32.mrf.mxu0
    %605 = vdwg.mxu0
    %v606 = vadd.f32 %v560, %v601
    %v607 = vxor.u32 %v606, 2147483648
    %v608 = vmul.f32 %v607, 1.442695
    %v609 = vpow.pop %v608
    %v610 = vadd.f32 %v609, 1.0
    %v611 = vrcp.pop %v610
    %v612 = vmul.f32 1.0, %v611
    %v613 = vtanh.pop %v606
    %v614 = vmul.f32 %v612, %v530
    %616 = vrot.lane.b32.xlu0 %v613, 64
    %v617 = vpop.permute.xlu0 %616
    %v619 = vmul.f32 %v612, %v617
    %621 = vrot.lane.b32.xlu0 %v619, 32
    %v622 = vpop.permute.xlu0 %621
    %v624 = vadd.f32 %v614, %v622
    %v625 = vtanh.pop %v624
    %627 = vrot.lane.b32.xlu0 %v625, 64
    %v628 = vpop.permute.xlu0 %627
    %v630 = vmul.f32 %v612, %v628
    %v631 = vpack.c.bf16 %v630, %v630
    %v634 = vunpack.c.l.s4 1966171168
    %v635 = vunpack.c.0.s8 %v634
    %v636 = vlaneseq
    %v637 = vshrl.u32 %v636, 7
    %v638 = vsub.s32 %v635, %v637
    %v639 = vrot.slane %v631, %v638
    %v641 = vunpack.c.l.s4 1966171168
    %v642 = vunpack.c.0.s8 %v641
    %v643 = vlaneseq
    %v644 = vshrl.u32 %v643, 7
    %v645 = vsub.s32 %v642, %v644
    %v646 = vrot.slane %v639, %v645
    %647 = vrot.lane.b32.xlu0 %v646, 32
    %v648 = vpop.permute.xlu0 %647
    %s650 = scalar_lea.vmem [#allocation7], 5
    %651 = vst.msk [vmem:[%s650] sm:$0x1] %vm180, %v648
    %s652 = scalar_lea.vmem [#allocation2], 6
    %v653 = vld [vmem:[%s652] sm:$0x1]
    %v654 = vunpack.c.l.bf16 %v653
    %655 = vrot.lane.b32.xlu0 %v631, 32
    %v656 = vpop.permute.xlu0 %655
    %v658 = vsel %vm81, %v656, 0
    %660 = vmatprep.subr.bf16.mxu0 0
    %661 = vmatpush1.bf16.msra.mxu0 0
    %662 = vmatprep.subr.bf16.mxu0 0
    %663 = vmatpush1.bf16.msra.mxu0 0
    %664 = vmatprep.subr.bf16.mxu0 0
    %665 = vmatpush1.bf16.msra.mxu0 0
    %666 = vmatprep.subr.bf16.mxu0 0
    %667 = vmatpush1.bf16.msra.mxu0 0
    %668 = vmatprep.subr.bf16.mxu0 0
    %669 = vmatpush1.bf16.msra.mxu0 0
    %670 = vmatprep.subr.bf16.mxu0 0
    %671 = vmatpush1.bf16.msra.mxu0 0
    %672 = vmatprep.subr.bf16.mxu0 0
    %673 = vmatpush1.bf16.msra.mxu0 %v78
    %674 = vmatprep.subr.bf16.mxu0 0
    %675 = vmatpush1.bf16.msra.mxu0 %v77
    %676 = vmatprep.subr.bf16.mxu0 0
    %677 = vmatpush2.bf16.msra.mxu0 0
    %678 = vmatprep.subr.bf16.mxu0 0
    %679 = vmatpush2.bf16.msra.mxu0 0
    %680 = vmatprep.subr.bf16.mxu0 0
    %681 = vmatpush2.bf16.msra.mxu0 0
    %682 = vmatprep.subr.bf16.mxu0 0
    %683 = vmatpush2.bf16.msra.mxu0 0
    %684 = vmatprep.subr.bf16.mxu0 0
    %685 = vmatpush2.bf16.msra.mxu0 0
    %686 = vmatprep.subr.bf16.mxu0 0
    %687 = vmatpush2.bf16.msra.mxu0 0
    %688 = vmatprep.subr.bf16.mxu0 0
    %689 = vmatpush2.bf16.msra.mxu0 0
    %690 = vmatprep.subr.bf16.mxu0 0
    %691 = vmatpush2.bf16.msra.mxu0 0
    %692 = vmatprep.mubr.bf16.mxu0 0
    %693 = vmatmul.mubr.bf16.gmra.mxu0 %v658
    %v694 = vpop.f32.mrf.mxu0
    %v695 = vadd.f32 0.0, %v694
    %v696 = vpop.f32.mrf.mxu0
    %v697 = vpop.f32.mrf.mxu0
    %v698 = vpop.f32.mrf.mxu0
    %699 = vdwg.mxu0
    %v700 = vadd.f32 %v654, %v695
    %v701 = vxor.u32 %v700, 2147483648
    %v702 = vmul.f32 %v701, 1.442695
    %v703 = vpow.pop %v702
    %v704 = vadd.f32 %v703, 1.0
    %v705 = vrcp.pop %v704
    %v706 = vmul.f32 1.0, %v705
    %v707 = vtanh.pop %v700
    %v708 = vmul.f32 %v706, %v624
    %710 = vrot.lane.b32.xlu0 %v707, 64
    %v711 = vpop.permute.xlu0 %710
    %v713 = vmul.f32 %v706, %v711
    %715 = vrot.lane.b32.xlu0 %v713, 32
    %v716 = vpop.permute.xlu0 %715
    %v718 = vadd.f32 %v708, %v716
    %v719 = vtanh.pop %v718
    %721 = vrot.lane.b32.xlu0 %v719, 64
    %v722 = vpop.permute.xlu0 %721
    %v724 = vmul.f32 %v706, %v722
    %v725 = vpack.c.bf16 %v724, %v724
    %v728 = vunpack.c.l.s4 1966171168
    %v729 = vunpack.c.0.s8 %v728
    %v730 = vlaneseq
    %v731 = vshrl.u32 %v730, 7
    %v732 = vsub.s32 %v729, %v731
    %v733 = vrot.slane %v725, %v732
    %v735 = vunpack.c.l.s4 1966171168
    %v736 = vunpack.c.0.s8 %v735
    %v737 = vlaneseq
    %v738 = vshrl.u32 %v737, 7
    %v739 = vsub.s32 %v736, %v738
    %v740 = vrot.slane %v733, %v739
    %741 = vrot.lane.b32.xlu0 %v740, 32
    %v742 = vpop.permute.xlu0 %741
    %s744 = scalar_lea.vmem [#allocation7], 6
    %745 = vst.msk [vmem:[%s744] sm:$0x1] %vm180, %v742
    %s746 = scalar_lea.vmem [#allocation2], 7
    %v747 = vld [vmem:[%s746] sm:$0x1]
    %v748 = vunpack.c.l.bf16 %v747
    %749 = vrot.lane.b32.xlu0 %v725, 32
    %v750 = vpop.permute.xlu0 %749
    %v752 = vsel %vm81, %v750, 0
    %754 = vmatprep.subr.bf16.mxu0 0
    %755 = vmatpush1.bf16.msra.mxu0 0
    %756 = vmatprep.subr.bf16.mxu0 0
    %757 = vmatpush1.bf16.msra.mxu0 0
    %758 = vmatprep.subr.bf16.mxu0 0
    %759 = vmatpush1.bf16.msra.mxu0 0
    %760 = vmatprep.subr.bf16.mxu0 0
    %761 = vmatpush1.bf16.msra.mxu0 0
    %762 = vmatprep.subr.bf16.mxu0 0
    %763 = vmatpush1.bf16.msra.mxu0 0
    %764 = vmatprep.subr.bf16.mxu0 0
    %765 = vmatpush1.bf16.msra.mxu0 0
    %766 = vmatprep.subr.bf16.mxu0 0
    %767 = vmatpush1.bf16.msra.mxu0 %v78
    %768 = vmatprep.subr.bf16.mxu0 0
    %769 = vmatpush1.bf16.msra.mxu0 %v77
    %770 = vmatprep.subr.bf16.mxu0 0
    %771 = vmatpush2.bf16.msra.mxu0 0
    %772 = vmatprep.subr.bf16.mxu0 0
    %773 = vmatpush2.bf16.msra.mxu0 0
    %774 = vmatprep.subr.bf16.mxu0 0
    %775 = vmatpush2.bf16.msra.mxu0 0
    %776 = vmatprep.subr.bf16.mxu0 0
    %777 = vmatpush2.bf16.msra.mxu0 0
    %778 = vmatprep.subr.bf16.mxu0 0
    %779 = vmatpush2.bf16.msra.mxu0 0
    %780 = vmatprep.subr.bf16.mxu0 0
    %781 = vmatpush2.bf16.msra.mxu0 0
    %782 = vmatprep.subr.bf16.mxu0 0
    %783 = vmatpush2.bf16.msra.mxu0 0
    %784 = vmatprep.subr.bf16.mxu0 0
    %785 = vmatpush2.bf16.msra.mxu0 0
    %786 = vmatprep.mubr.bf16.mxu0 0
    %787 = vmatmul.mubr.bf16.gmra.mxu0 %v752
    %v788 = vpop.f32.mrf.mxu0
    %v789 = vadd.f32 0.0, %v788
    %v790 = vpop.f32.mrf.mxu0
    %v791 = vpop.f32.mrf.mxu0
    %v792 = vpop.f32.mrf.mxu0
    %793 = vdwg.mxu0
    %v794 = vadd.f32 %v748, %v789
    %v795 = vxor.u32 %v794, 2147483648
    %v796 = vmul.f32 %v795, 1.442695
    %v797 = vpow.pop %v796
    %v798 = vadd.f32 %v797, 1.0
    %v799 = vrcp.pop %v798
    %v800 = vmul.f32 1.0, %v799
    %v801 = vtanh.pop %v794
    %v802 = vmul.f32 %v800, %v718
    %804 = vrot.lane.b32.xlu0 %v801, 64
    %v805 = vpop.permute.xlu0 %804
    %v807 = vmul.f32 %v800, %v805
    %809 = vrot.lane.b32.xlu0 %v807, 32
    %v810 = vpop.permute.xlu0 %809
    %v812 = vadd.f32 %v802, %v810
    %v813 = vtanh.pop %v812
    %815 = vrot.lane.b32.xlu0 %v813, 64
    %v816 = vpop.permute.xlu0 %815
    %v818 = vmul.f32 %v800, %v816
    %v819 = vpack.c.bf16 %v818, %v818
    %v822 = vunpack.c.l.s4 1966171168
    %v823 = vunpack.c.0.s8 %v822
    %v824 = vlaneseq
    %v825 = vshrl.u32 %v824, 7
    %v826 = vsub.s32 %v823, %v825
    %v827 = vrot.slane %v819, %v826
    %v829 = vunpack.c.l.s4 1966171168
    %v830 = vunpack.c.0.s8 %v829
    %v831 = vlaneseq
    %v832 = vshrl.u32 %v831, 7
    %v833 = vsub.s32 %v830, %v832
    %v834 = vrot.slane %v827, %v833
    %835 = vrot.lane.b32.xlu0 %v834, 32
    %v836 = vpop.permute.xlu0 %835
    %s838 = scalar_lea.vmem [#allocation7], 7
    %839 = vst.msk [vmem:[%s838] sm:$0x1] %vm180, %v836
    %v842 = vunpack.c.l.s4 1983009808
    %v843 = vunpack.c.0.s8 %v842
    %v844 = vlaneseq
    %v845 = vshrl.u32 %v844, 7
    %v846 = vsub.s32 %v843, %v845
    %v847 = vrot.slane %v818, %v846
    %848 = vrot.lane.b32.xlu0 %v847, 32
    %v849 = vpop.permute.xlu0 %848
    %vm851 = vcmask 254976
    %852 = vst.msk [vmem:[#allocation8] sm:$0x3] %vm851, %v849
    %v855 = vunpack.c.l.s4 1983009808
    %v856 = vunpack.c.0.s8 %v855
    %v857 = vlaneseq
    %v858 = vshrl.u32 %v857, 7
    %v859 = vsub.s32 %v856, %v858
    %v860 = vrot.slane %v812, %v859
    %861 = vrot.lane.b32.xlu0 %v860, 96
    %v862 = vpop.permute.xlu0 %861
    %864 = vst.msk [vmem:[#allocation10] sm:$0x3] %vm851, %v862
    // Predicated region
    $region30: #{tpu_custom_call.1} parent=1 // pred_check
      _
    $region31: #{tpu_custom_call.1} parent=1 // pred_check_branch
      %866 = sbr.rel (0) target = $region33
    $region32: #{tpu_custom_call.1} parent=1 // pred_region
      %s868 = ssub.s32 128, 128
      %869 = vsyncadd [#allocation4], %s868
      %s870 = sshll.u32 [#allocation7], 4
      %s871 = int_to_ptr.vmem [resolvable:$true] %s870
      %876 = dma.vmem_to_hbm [thread:$0]  %s871, 128, %s4, [#allocation4], 16, 16, 1
    $region33: #{tpu_custom_call.1} parent=1 // pred_fallthru
      _
    // Predicated region
    $region34: #{tpu_custom_call.1} parent=1 // pred_check
      _
    $region35: #{tpu_custom_call.1} parent=1 // pred_check_branch
      %878 = sbr.rel (0) target = $region37
    $region36: #{tpu_custom_call.1} parent=1 // pred_region
      %s880 = ssub.s32 32, 32
      %881 = vsyncadd [#allocation9], %s880
      %s883 = sshll.u32 [#allocation8], 4
      %s884 = int_to_ptr.vmem [resolvable:$true] %s883
      %886 = dma.vmem_to_hbm [thread:$0]  %s884, 32, %s5, [#allocation9]
    $region37: #{tpu_custom_call.1} parent=1 // pred_fallthru
      _
    // Predicated region
    $region38: #{tpu_custom_call.1} parent=1 // pred_check
      _
    $region39: #{tpu_custom_call.1} parent=1 // pred_check_branch
      %888 = sbr.rel (0) target = $region41
    $region40: #{tpu_custom_call.1} parent=1 // pred_region
      %s890 = ssub.s32 32, 32
      %891 = vsyncadd [#allocation9], %s890
      %s893 = sshll.u32 [#allocation10], 4
      %s894 = int_to_ptr.vmem [resolvable:$true] %s893
      %896 = dma.vmem_to_hbm [thread:$0]  %s894, 32, %s6, [#allocation9]
    $region41: #{tpu_custom_call.1} parent=1 // pred_fallthru
      _
    // Predicated region
    $region42: #{tpu_custom_call.1} parent=1 // pred_check
      _
    $region43: #{tpu_custom_call.1} parent=1 // pred_check_branch
      %898 = sbr.rel (0) target = $region45
    $region44: #{tpu_custom_call.1} parent=1 // pred_region
      %899 = dma.done [#allocation4], 128
    $region45: #{tpu_custom_call.1} parent=1 // pred_fallthru
      _
    // Predicated region
    $region46: #{tpu_custom_call.1} parent=1 // pred_check
      _
    $region47: #{tpu_custom_call.1} parent=1 // pred_check_branch
      %901 = sbr.rel (0) target = $region49
    $region48: #{tpu_custom_call.1} parent=1 // pred_region
      %902 = dma.done [#allocation9], 32
    $region49: #{tpu_custom_call.1} parent=1 // pred_fallthru
      _
    // Predicated region
    $region50: #{tpu_custom_call.1} parent=1 // pred_check
      _
    $region51: #{tpu_custom_call.1} parent=1 // pred_check_branch
      %904 = sbr.rel (0) target = $region53
    $region52: #{tpu_custom_call.1} parent=1 // pred_region
      %905 = dma.done [#allocation9], 32
    $region53: #{tpu_custom_call.1} parent=1 // pred_fallthru
      _
    %906 = vsyncpa [#allocation3], 1
    %907 = vsyncpa [#allocation6], 1
    %908 = vsyncpa [#allocation4], 1
    %909 = vsyncpa [#allocation9], 1

</llo_original>
